<compile_context>
chip_gen: v6e
topology: v6e:2x2x1
jax: 0.10.0
libtpu: 0.0.40
codegen_flags: <defaults>
</compile_context>

<pallas_src>
import functools

import jax
import jax.numpy as jnp
from jax import lax
from jax.experimental import pallas as pl
from jax.experimental.pallas import tpu as pltpu

# Set to jnp.bfloat16 on v6e/v7x production runs (MXU native rate, half the
# weight/activation bytes); f32 here to keep the 1e-4 reference tolerance.
_MATMUL_DTYPE = jnp.float32


def _resblock_kernel(x_ref, w1_ref, b1_ref, w2_ref, b2_ref, w3_ref, b3_ref,
                     o_ref, pad_ref, *, n, h, w, c, mm_dtype):
    """One grid step == one residual block for one batch shard.

    x_ref, o_ref : (n*h*w, c)   o_ref doubles as the persistent activation state
    w1/w3        : (c, c), w2 : (9*c, c), biases : (1, c)
    pad_ref      : (n, h+2, w+2, c) persistent scratch with a zero border
    """
    blk = pl.program_id(1)
    nhw = n * h * w

    @pl.when(blk == 0)
    def _():
        pad_ref[...] = jnp.zeros_like(pad_ref)   # zero the border once per shard
        o_ref[...] = x_ref[...]                  # initialize the residual state

    x = o_ref[...]                               # f32 state, (nhw, c)

    # --- Conv2d(c, c, kernel_size=1) ---
    t1 = jnp.dot(x.astype(mm_dtype), w1_ref[...].astype(mm_dtype),
                 preferred_element_type=jnp.float32) + b1_ref[...]

    # --- Conv2d(c, c, kernel_size=3, stride=1, padding=1) ---
    # store conv1 output into the interior of the persistent padded scratch
    pad_ref[:, 1:h + 1, 1:w + 1, :] = t1.reshape(n, h, w, c)
    # fused im2col: 9 shifted windows concatenated on the channel axis -> K = 9*c
    win9 = jnp.concatenate(
        [pad_ref[:, dy:dy + h, dx:dx + w, :].reshape(nhw, c)
         for dy in range(3) for dx in range(3)], axis=-1)
    t2 = jnp.dot(win9.astype(mm_dtype), w2_ref[...].astype(mm_dtype),
                 preferred_element_type=jnp.float32) + b2_ref[...]

    # --- Conv2d(c, c, kernel_size=1) ---
    t3 = jnp.dot(t2.astype(mm_dtype), w3_ref[...].astype(mm_dtype),
                 preferred_element_type=jnp.float32) + b3_ref[...]

    # --- residual add + ReLU, written straight into the resident state ---
    o_ref[...] = jnp.maximum(x + t3, 0.0)


def _tile_bytes(shape, itemsize=4):
    """VMEM footprint of `shape` after (8, 128) tiling of the last two dims."""
    shape = tuple(shape)
    if len(shape) == 1:
        shape = (1,) + shape
    lead = 1
    for d in shape[:-2]:
        lead *= d
    sub = -(-shape[-2] // 8) * 8
    lane = -(-shape[-1] // 128) * 128
    return lead * sub * lane * itemsize


@functools.partial(jax.jit, static_argnames=("num_blocks",))
def resblock_forward(x_nchw, params, num_blocks):
    """x_nchw: (N, C, H, W) float32; params: dict of stacked per-block weights."""
    N, C, H, W = x_nchw.shape
    # NCHW -> NHWC -> lane-friendly 2-D working shape (N*H*W, C)
    x2d = jnp.transpose(x_nchw, (0, 2, 3, 1)).reshape(N * H * W, C)

    w1, b1, w3, b3 = params["w1"], params["b1"], params["w3"], params["b3"]
    # fold the 3x3 taps into the contraction dim: (B, 3, 3, Cin, Cout) -> (B, 9*Cin, Cout)
    w2 = params["w2"].reshape(num_blocks, 9 * C, C)
    b2 = params["b2"]

    # leading "parallel" grid axis splits the batch across TensorCores (v7x)
    n_split = 2 if (N % 2 == 0 and N >= 2) else 1
    n_loc = N // n_split
    nhw_loc = n_loc * H * W

    kernel = functools.partial(_resblock_kernel, n=n_loc, h=H, w=W, c=C,
                               mm_dtype=_MATMUL_DTYPE)

    # Scoped-VMEM budget: state/input (double-buffered), padded scratch, weights.
    weight_shapes = [(C, C), (1, C), (9 * C, C), (1, C), (C, C), (1, C)]
    vmem_needed = (2 * 2 * _tile_bytes((nhw_loc, C))
                   + _tile_bytes((n_loc * (H + 2), W + 2, C))
                   + 2 * sum(_tile_bytes(s) for s in weight_shapes))
    vmem_limit = int(min(max(2 * vmem_needed, 16 << 20), 48 << 20))

    out2d = pl.pallas_call(
        kernel,
        out_shape=jax.ShapeDtypeStruct((N * H * W, C), jnp.float32),
        grid_spec=pltpu.PrefetchScalarGridSpec(
            num_scalar_prefetch=0,
            grid=(n_split, num_blocks),
            in_specs=[
                pl.BlockSpec((nhw_loc, C), lambda p, b: (p, 0)),         # x
                pl.BlockSpec((None, C, C), lambda p, b: (b, 0, 0)),      # w1
                pl.BlockSpec((None, 1, C), lambda p, b: (b, 0, 0)),      # b1
                pl.BlockSpec((None, 9 * C, C), lambda p, b: (b, 0, 0)),  # w2 (fused K)
                pl.BlockSpec((None, 1, C), lambda p, b: (b, 0, 0)),      # b2
                pl.BlockSpec((None, C, C), lambda p, b: (b, 0, 0)),      # w3
                pl.BlockSpec((None, 1, C), lambda p, b: (b, 0, 0)),      # b3
            ],
            out_specs=pl.BlockSpec((nhw_loc, C), lambda p, b: (p, 0)),
            scratch_shapes=[pltpu.VMEM((n_loc, H + 2, W + 2, C), jnp.float32)],
        ),
        compiler_params=pltpu.CompilerParams(
            dimension_semantics=("parallel", "arbitrary"),
            vmem_limit_bytes=vmem_limit),
    )(x2d, w1, b1, w2, b2, w3, b3)

    return jnp.transpose(out2d.reshape(N, H, W, C), (0, 3, 1, 2))  # NHWC -> NCHW


def init_params(key, num_in, num_blocks):
    """Deterministic synthetic parameters; layouts chosen for the NHWC kernel."""
    ks = jax.random.split(key, 6)
    scale = 0.2
    return {
        "w1": scale * jax.random.normal(ks[0], (num_blocks, num_in, num_in), jnp.float32),
        "b1": scale * jax.random.normal(ks[1], (num_blocks, 1, num_in), jnp.float32),
        "w2": scale * jax.random.normal(ks[2], (num_blocks, 3, 3, num_in, num_in), jnp.float32),
        "b2": scale * jax.random.normal(ks[3], (num_blocks, 1, num_in), jnp.float32),
        "w3": scale * jax.random.normal(ks[4], (num_blocks, num_in, num_in), jnp.float32),
        "b3": scale * jax.random.normal(ks[5], (num_blocks, 1, num_in), jnp.float32),
    }


def _reference_forward(x_nchw, params, num_blocks):
    """Pure-JAX reference (NHWC convs) replicating the PyTorch forward."""
    x = jnp.transpose(x_nchw, (0, 2, 3, 1))
    dn = lax.conv_dimension_numbers(x.shape, (1, 1, x.shape[-1], x.shape[-1]),
                                    ("NHWC", "HWIO", "NHWC"))
    for b in range(num_blocks):
        t = lax.conv_general_dilated(x, params["w1"][b][None, None], (1, 1),
                                     "VALID", dimension_numbers=dn) + params["b1"][b]
        t = lax.conv_general_dilated(t, params["w2"][b], (1, 1),
                                     "SAME", dimension_numbers=dn) + params["b2"][b]
        t = lax.conv_general_dilated(t, params["w3"][b][None, None], (1, 1),
                                     "VALID", dimension_numbers=dn) + params["b3"][b]
        x = jnp.maximum(x + t, 0.0)
    return jnp.transpose(x, (0, 3, 1, 2))


if __name__ == "__main__":
    N, C, H, W = 2, 4, 16, 16
    num_blocks = 2

    key = jax.random.PRNGKey(0)
    kx, kp = jax.random.split(key)
    x = jax.random.normal(kx, (N, C, H, W), jnp.float32)
    params = init_params(kp, C, num_blocks)

    out = resblock_forward(x, params, num_blocks)
    out = jax.block_until_ready(out)

    ref = _reference_forward(x, params, num_blocks)
    assert out.shape == (N, C, H, W)
    assert jnp.allclose(out, ref, atol=1e-4, rtol=1e-4), "mismatch vs reference"

    print("KERNEL_OK")
</pallas_src>

<mosaic_0001>
module attributes {stable_mosaic.version = 11 : i64} {
  func.func @_resblock_kernel(%arg0: i32, %arg1: i32, %arg2: memref<256x4xf32, #tpu.memory_space<vmem>>, %arg3: memref<1x4x4xf32, #tpu.memory_space<vmem>>, %arg4: memref<1x1x4xf32, #tpu.memory_space<vmem>>, %arg5: memref<1x36x4xf32, #tpu.memory_space<vmem>>, %arg6: memref<1x1x4xf32, #tpu.memory_space<vmem>>, %arg7: memref<1x4x4xf32, #tpu.memory_space<vmem>>, %arg8: memref<1x1x4xf32, #tpu.memory_space<vmem>>, %arg9: memref<256x4xf32, #tpu.memory_space<vmem>>, %arg10: memref<1x18x18x4xf32, #tpu.memory_space<vmem>>) attributes {dimension_semantics = [#tpu.dimension_semantics<parallel>, #tpu.dimension_semantics<arbitrary>], iteration_bounds = array<i64: 2, 2>, scalar_prefetch = 0 : i64, scratch_operands = 1 : i64, tpu.core_type = #tpu.core_type<tc>, window_params = [{transform_indices = @transform_0, window_bounds = array<i64: 256, 4>}, {transform_indices = @transform_1, window_bounds = array<i64: 1, 4, 4>}, {transform_indices = @transform_2, window_bounds = array<i64: 1, 1, 4>}, {transform_indices = @transform_3, window_bounds = array<i64: 1, 36, 4>}, {transform_indices = @transform_4, window_bounds = array<i64: 1, 1, 4>}, {transform_indices = @transform_5, window_bounds = array<i64: 1, 4, 4>}, {transform_indices = @transform_6, window_bounds = array<i64: 1, 1, 4>}, {transform_indices = @transform_7, window_bounds = array<i64: 256, 4>}]} {
    %c0_i32 = arith.constant 0 : i32
    %0 = arith.cmpi eq, %arg1, %c0_i32 : i32
    %1 = arith.extui %0 : i1 to i32
    %c0_i32_0 = arith.constant 0 : i32
    %2 = arith.cmpi ne, %1, %c0_i32_0 : i32
    scf.if %2 {
      %cst_63 = arith.constant 0.000000e+00 : f32
      %50 = vector.broadcast %cst_63 : f32 to vector<1x18x18x4xf32>
      %c0_64 = arith.constant 0 : index
      %c0_65 = arith.constant 0 : index
      %c0_66 = arith.constant 0 : index
      %c0_67 = arith.constant 0 : index
      %51 = vector.load %arg10[%c0_64, %c0_65, %c0_66, %c0_67] : memref<1x18x18x4xf32, #tpu.memory_space<vmem>>, vector<1x18x18x4xf32>
      tpu.vector_store %arg10[%c0_64, %c0_65, %c0_66, %c0_67], %50 {strides = array<i32>} : memref<1x18x18x4xf32, #tpu.memory_space<vmem>>, vector<1x18x18x4xf32>,
      %c0_68 = arith.constant 0 : index
      %c0_69 = arith.constant 0 : index
      %52 = vector.load %arg2[%c0_68, %c0_69] : memref<256x4xf32, #tpu.memory_space<vmem>>, vector<256x4xf32>
      %c0_70 = arith.constant 0 : index
      %c0_71 = arith.constant 0 : index
      %53 = vector.load %arg9[%c0_70, %c0_71] : memref<256x4xf32, #tpu.memory_space<vmem>>, vector<256x4xf32>
      tpu.vector_store %arg9[%c0_70, %c0_71], %52 {strides = array<i32>} : memref<256x4xf32, #tpu.memory_space<vmem>>, vector<256x4xf32>,
    } else {
    }
    %c0 = arith.constant 0 : index
    %c0_1 = arith.constant 0 : index
    %3 = vector.load %arg9[%c0, %c0_1] : memref<256x4xf32, #tpu.memory_space<vmem>>, vector<256x4xf32>
    %c0_2 = arith.constant 0 : index
    %c0_3 = arith.constant 0 : index
    %c0_4 = arith.constant 0 : index
    %4 = vector.load %arg3[%c0_2, %c0_3, %c0_4] : memref<1x4x4xf32, #tpu.memory_space<vmem>>, vector<1x4x4xf32>
    %5 = vector.shape_cast %4 : vector<1x4x4xf32> to vector<4x4xf32>
    %cst = arith.constant dense<0.000000e+00> : vector<256x4xf32>
    %6 = tpu.matmul %3, %5, %cst {dimension_numbers = #tpu.dot_dimension_numbers<[1], [0], [0], [1], [0, 0, 1, 1], [], []>} : vector<256x4xf32>, vector<4x4xf32>, vector<256x4xf32> -> vector<256x4xf32>
    %c0_5 = arith.constant 0 : index
    %c0_6 = arith.constant 0 : index
    %c0_7 = arith.constant 0 : index
    %7 = vector.load %arg4[%c0_5, %c0_6, %c0_7] : memref<1x1x4xf32, #tpu.memory_space<vmem>>, vector<1x1x4xf32>
    %8 = vector.shape_cast %7 : vector<1x1x4xf32> to vector<1x4xf32>
    %9 = vector.broadcast %8 : vector<1x4xf32> to vector<256x4xf32>
    %10 = arith.addf %6, %9 : vector<256x4xf32>
    %11 = vector.shape_cast %10 : vector<256x4xf32> to vector<1x16x16x4xf32>
    %c0_8 = arith.constant 0 : index
    %c1 = arith.constant 1 : index
    %c1_9 = arith.constant 1 : index
    %c0_10 = arith.constant 0 : index
    %12 = vector.load %arg10[%c0_8, %c1, %c1_9, %c0_10] : memref<1x18x18x4xf32, #tpu.memory_space<vmem>>, vector<1x16x16x4xf32>
    tpu.vector_store %arg10[%c0_8, %c1, %c1_9, %c0_10], %11 {strides = array<i32>} : memref<1x18x18x4xf32, #tpu.memory_space<vmem>>, vector<1x16x16x4xf32>,
    %c0_11 = arith.constant 0 : index
    %c0_12 = arith.constant 0 : index
    %c0_13 = arith.constant 0 : index
    %c0_14 = arith.constant 0 : index
    %13 = vector.load %arg10[%c0_11, %c0_12, %c0_13, %c0_14] : memref<1x18x18x4xf32, #tpu.memory_space<vmem>>, vector<1x16x16x4xf32>
    %14 = vector.shape_cast %13 : vector<1x16x16x4xf32> to vector<256x4xf32>
    %c0_15 = arith.constant 0 : index
    %c0_16 = arith.constant 0 : index
    %c1_17 = arith.constant 1 : index
    %c0_18 = arith.constant 0 : index
    %15 = vector.load %arg10[%c0_15, %c0_16, %c1_17, %c0_18] : memref<1x18x18x4xf32, #tpu.memory_space<vmem>>, vector<1x16x16x4xf32>
    %16 = vector.shape_cast %15 : vector<1x16x16x4xf32> to vector<256x4xf32>
    %c0_19 = arith.constant 0 : index
    %c0_20 = arith.constant 0 : index
    %c2 = arith.constant 2 : index
    %c0_21 = arith.constant 0 : index
    %17 = vector.load %arg10[%c0_19, %c0_20, %c2, %c0_21] : memref<1x18x18x4xf32, #tpu.memory_space<vmem>>, vector<1x16x16x4xf32>
    %18 = vector.shape_cast %17 : vector<1x16x16x4xf32> to vector<256x4xf32>
    %c0_22 = arith.constant 0 : index
    %c1_23 = arith.constant 1 : index
    %c0_24 = arith.constant 0 : index
    %c0_25 = arith.constant 0 : index
    %19 = vector.load %arg10[%c0_22, %c1_23, %c0_24, %c0_25] : memref<1x18x18x4xf32, #tpu.memory_space<vmem>>, vector<1x16x16x4xf32>
    %20 = vector.shape_cast %19 : vector<1x16x16x4xf32> to vector<256x4xf32>
    %c0_26 = arith.constant 0 : index
    %c1_27 = arith.constant 1 : index
    %c1_28 = arith.constant 1 : index
    %c0_29 = arith.constant 0 : index
    %21 = vector.load %arg10[%c0_26, %c1_27, %c1_28, %c0_29] : memref<1x18x18x4xf32, #tpu.memory_space<vmem>>, vector<1x16x16x4xf32>
    %22 = vector.shape_cast %21 : vector<1x16x16x4xf32> to vector<256x4xf32>
    %c0_30 = arith.constant 0 : index
    %c1_31 = arith.constant 1 : index
    %c2_32 = arith.constant 2 : index
    %c0_33 = arith.constant 0 : index
    %23 = vector.load %arg10[%c0_30, %c1_31, %c2_32, %c0_33] : memref<1x18x18x4xf32, #tpu.memory_space<vmem>>, vector<1x16x16x4xf32>
    %24 = vector.shape_cast %23 : vector<1x16x16x4xf32> to vector<256x4xf32>
    %c0_34 = arith.constant 0 : index
    %c2_35 = arith.constant 2 : index
    %c0_36 = arith.constant 0 : index
    %c0_37 = arith.constant 0 : index
    %25 = vector.load %arg10[%c0_34, %c2_35, %c0_36, %c0_37] : memref<1x18x18x4xf32, #tpu.memory_space<vmem>>, vector<1x16x16x4xf32>
    %26 = vector.shape_cast %25 : vector<1x16x16x4xf32> to vector<256x4xf32>
    %c0_38 = arith.constant 0 : index
    %c2_39 = arith.constant 2 : index
    %c1_40 = arith.constant 1 : index
    %c0_41 = arith.constant 0 : index
    %27 = vector.load %arg10[%c0_38, %c2_39, %c1_40, %c0_41] : memref<1x18x18x4xf32, #tpu.memory_space<vmem>>, vector<1x16x16x4xf32>
    %28 = vector.shape_cast %27 : vector<1x16x16x4xf32> to vector<256x4xf32>
    %c0_42 = arith.constant 0 : index
    %c2_43 = arith.constant 2 : index
    %c2_44 = arith.constant 2 : index
    %c0_45 = arith.constant 0 : index
    %29 = vector.load %arg10[%c0_42, %c2_43, %c2_44, %c0_45] : memref<1x18x18x4xf32, #tpu.memory_space<vmem>>, vector<1x16x16x4xf32>
    %30 = vector.shape_cast %29 : vector<1x16x16x4xf32> to vector<256x4xf32>
    %31 = tpu.concatenate %14, %16, %18, %20, %22, %24, %26, %28, %30 in 1 : vector<256x4xf32>, vector<256x4xf32>, vector<256x4xf32>, vector<256x4xf32>, vector<256x4xf32>, vector<256x4xf32>, vector<256x4xf32>, vector<256x4xf32>, vector<256x4xf32> -> vector<256x36xf32>
    %c0_46 = arith.constant 0 : index
    %c0_47 = arith.constant 0 : index
    %c0_48 = arith.constant 0 : index
    %32 = vector.load %arg5[%c0_46, %c0_47, %c0_48] : memref<1x36x4xf32, #tpu.memory_space<vmem>>, vector<1x36x4xf32>
    %33 = vector.shape_cast %32 : vector<1x36x4xf32> to vector<36x4xf32>
    %cst_49 = arith.constant dense<0.000000e+00> : vector<256x4xf32>
    %34 = tpu.matmul %31, %33, %cst_49 {dimension_numbers = #tpu.dot_dimension_numbers<[1], [0], [0], [1], [0, 0, 1, 1], [], []>} : vector<256x36xf32>, vector<36x4xf32>, vector<256x4xf32> -> vector<256x4xf32>
    %c0_50 = arith.constant 0 : index
    %c0_51 = arith.constant 0 : index
    %c0_52 = arith.constant 0 : index
    %35 = vector.load %arg6[%c0_50, %c0_51, %c0_52] : memref<1x1x4xf32, #tpu.memory_space<vmem>>, vector<1x1x4xf32>
    %36 = vector.shape_cast %35 : vector<1x1x4xf32> to vector<1x4xf32>
    %37 = vector.broadcast %36 : vector<1x4xf32> to vector<256x4xf32>
    %38 = arith.addf %34, %37 : vector<256x4xf32>
    %c0_53 = arith.constant 0 : index
    %c0_54 = arith.constant 0 : index
    %c0_55 = arith.constant 0 : index
    %39 = vector.load %arg7[%c0_53, %c0_54, %c0_55] : memref<1x4x4xf32, #tpu.memory_space<vmem>>, vector<1x4x4xf32>
    %40 = vector.shape_cast %39 : vector<1x4x4xf32> to vector<4x4xf32>
    %cst_56 = arith.constant dense<0.000000e+00> : vector<256x4xf32>
    %41 = tpu.matmul %38, %40, %cst_56 {dimension_numbers = #tpu.dot_dimension_numbers<[1], [0], [0], [1], [0, 0, 1, 1], [], []>} : vector<256x4xf32>, vector<4x4xf32>, vector<256x4xf32> -> vector<256x4xf32>
    %c0_57 = arith.constant 0 : index
    %c0_58 = arith.constant 0 : index
    %c0_59 = arith.constant 0 : index
    %42 = vector.load %arg8[%c0_57, %c0_58, %c0_59] : memref<1x1x4xf32, #tpu.memory_space<vmem>>, vector<1x1x4xf32>
    %43 = vector.shape_cast %42 : vector<1x1x4xf32> to vector<1x4xf32>
    %44 = vector.broadcast %43 : vector<1x4xf32> to vector<256x4xf32>
    %45 = arith.addf %41, %44 : vector<256x4xf32>
    %46 = arith.addf %3, %45 : vector<256x4xf32>
    %cst_60 = arith.constant 0.000000e+00 : f32
    %47 = vector.broadcast %cst_60 : f32 to vector<256x4xf32>
    %48 = arith.maximumf %46, %47 : vector<256x4xf32>
    %c0_61 = arith.constant 0 : index
    %c0_62 = arith.constant 0 : index
    %49 = vector.load %arg9[%c0_61, %c0_62] : memref<256x4xf32, #tpu.memory_space<vmem>>, vector<256x4xf32>
    tpu.vector_store %arg9[%c0_61, %c0_62], %48 {strides = array<i32>} : memref<256x4xf32, #tpu.memory_space<vmem>>, vector<256x4xf32>,
    return
  }
  func.func @transform_0(%arg0: i32, %arg1: i32) -> (i32, i32) {
    %c0_i32 = arith.constant 0 : i32
    %c0_i32_0 = arith.constant 0 : i32
    return %arg0, %c0_i32 : i32, i32
  }
  func.func @transform_1(%arg0: i32, %arg1: i32) -> (i32, i32, i32) {
    %c0_i32 = arith.constant 0 : i32
    %c0_i32_0 = arith.constant 0 : i32
    %c0_i32_1 = arith.constant 0 : i32
    return %arg1, %c0_i32, %c0_i32_0 : i32, i32, i32
  }
  func.func @transform_2(%arg0: i32, %arg1: i32) -> (i32, i32, i32) {
    %c0_i32 = arith.constant 0 : i32
    %c0_i32_0 = arith.constant 0 : i32
    %c0_i32_1 = arith.constant 0 : i32
    return %arg1, %c0_i32, %c0_i32_0 : i32, i32, i32
  }
  func.func @transform_3(%arg0: i32, %arg1: i32) -> (i32, i32, i32) {
    %c0_i32 = arith.constant 0 : i32
    %c0_i32_0 = arith.constant 0 : i32
    %c0_i32_1 = arith.constant 0 : i32
    return %arg1, %c0_i32, %c0_i32_0 : i32, i32, i32
  }
  func.func @transform_4(%arg0: i32, %arg1: i32) -> (i32, i32, i32) {
    %c0_i32 = arith.constant 0 : i32
    %c0_i32_0 = arith.constant 0 : i32
    %c0_i32_1 = arith.constant 0 : i32
    return %arg1, %c0_i32, %c0_i32_0 : i32, i32, i32
  }
  func.func @transform_5(%arg0: i32, %arg1: i32) -> (i32, i32, i32) {
    %c0_i32 = arith.constant 0 : i32
    %c0_i32_0 = arith.constant 0 : i32
    %c0_i32_1 = arith.constant 0 : i32
    return %arg1, %c0_i32, %c0_i32_0 : i32, i32, i32
  }
  func.func @transform_6(%arg0: i32, %arg1: i32) -> (i32, i32, i32) {
    %c0_i32 = arith.constant 0 : i32
    %c0_i32_0 = arith.constant 0 : i32
    %c0_i32_1 = arith.constant 0 : i32
    return %arg1, %c0_i32, %c0_i32_0 : i32, i32, i32
  }
  func.func @transform_7(%arg0: i32, %arg1: i32) -> (i32, i32) {
    %c0_i32 = arith.constant 0 : i32
    %c0_i32_0 = arith.constant 0 : i32
    return %arg0, %c0_i32 : i32, i32
  }
}

</mosaic_0001>

<llo_original>
// kernel: resblock_forward.1
$region0: #{resblock_forward.1}
  #allocation0 [shape = 'u32[]', space=smem, size = 0x4, offset = 0x4, fixed_abs, tag = 'smem constant byte address 0x4 - core index']
  #allocation1 [shape = 'u32[144,128]{1,0:T(1,128)}', space=vmem, size = 0x12000, scoped, tag = 'internal scratch']
  #allocation2 [shape = 'f32[1,18,18,4]{3,2,1,0:T(8,128)}', space=vmem, size = 0x36000, scoped, tag = 'scratch operand']
  %s0 = inlined_call_operand.vmem [shape: f32[512,4], index: 0, kind: input, shape index: {}]
  %s1 = inlined_call_operand.vmem [shape: f32[2,4,4], index: 1, kind: input, shape index: {}]
  %s2 = inlined_call_operand.vmem [shape: f32[2,1,4], index: 2, kind: input, shape index: {}]
  %s3 = inlined_call_operand.vmem [shape: f32[2,36,4], index: 3, kind: input, shape index: {}]
  %s4 = inlined_call_operand.vmem [shape: f32[2,1,4], index: 4, kind: input, shape index: {}]
  %s5 = inlined_call_operand.vmem [shape: f32[2,4,4], index: 5, kind: input, shape index: {}]
  %s6 = inlined_call_operand.vmem [shape: f32[2,1,4], index: 6, kind: input, shape index: {}]
  %s7 = inlined_call_operand.vmem [shape: f32[512,4], index: 7, kind: output, shape index: {}]
  %s8 = sld [smem:[#allocation0]]
  $region65: #{resblock_forward.1} parent=0
    _
  %s10 = ssub.s32 1, %s8
  %s11 = scalar_select 0, %s10, %s8
  loop: start=0, step=1, limit=6
  $region2: #{resblock_forward.1} parent=0 // loop_pre_header
    _
  $region3: #{resblock_forward.1} parent=0 // loop_header
    %s13 = sphi 0, %s17
    %p14 = scmp.ge.s32.totalorder %s13, 6
    %s20 = sphi 0, %s32
    %s21 = sphi 0, %s28
    %s22 = sphi 0, %s20
    %s23 = sphi 0, %s21
    %s24 = sphi 0, %s22
    %s25 = sphi 0, %s23
    %s35 = sphi 0, %s37
    %s38 = sphi 0, %s35
    %s39 = sphi 0, %s38
    %s55 = sphi 0, %s39
    %s61 = sphi 0, %s63
    %s64 = sphi 0, %s61
    %s65 = sphi 0, %s64
    %s81 = sphi 0, %s65
    %s87 = sphi 0, %s89
    %s90 = sphi 0, %s87
    %s91 = sphi 0, %s90
    %s107 = sphi 0, %s91
    %s113 = sphi 0, %s115
    %s116 = sphi 0, %s113
    %s117 = sphi 0, %s116
    %s133 = sphi 0, %s117
    %s139 = sphi 0, %s141
    %s142 = sphi 0, %s139
    %s143 = sphi 0, %s142
    %s159 = sphi 0, %s143
    %s165 = sphi 0, %s167
    %s168 = sphi 0, %s165
    %s169 = sphi 0, %s168
    %s185 = sphi 0, %s169
    %s191 = sphi 0, %s193
    %s194 = sphi 0, %s191
    %s195 = sphi 0, %s194
    %s211 = sphi 0, %s195
    %s217 = sphi 0, %s219
    %s220 = sphi 0, %s217
    %s221 = sphi 0, %s220
    %s237 = sphi 0, %s221
  $region4: #{resblock_forward.1} parent=0 // loop_header_branch
    %16 = sbr.rel (%p14) target = $region8
  $region5: #{resblock_forward.1} parent=0 // loop_body
    %s18 = ssub.s32 %s13, 1
    %s19 = ssub.s32 %s13, 2
    %s26 = sadd.s32 1, %s21
    %p27 = scmp.ge.s32.totalorder %s26, 2
    %s28 = scalar_select %p27, 0, %s26
    %s29 = sadd.s32 1, %s20
    %s30 = scalar_select %p27, %s29, %s20
    %p31 = scmp.ge.s32.totalorder %s30, 2
    %s32 = scalar_select %p31, 0, %s30
    %s33 = ssub.s32 %s20, %s32
    %p34 = scmp.eq.s32.totalorder %s33, 0
    %s36 = sadd.s32 %s35, 1
    %s37 = scalar_select %p34, %s35, %s36
    %p40 = pneg %p34
    %p41 = scmp.eq.s32.totalorder %s13, 3
    %p42 = por %p40, %p41
    %p43 = scmp.ne.s32.totalorder %s35, %s38
    %p44 = scmp.eq.s32.totalorder %s13, 0
    %p45 = por %p43, %p44
    %p46 = scmp.ne.s32.totalorder %s35, %s38
    %p47 = scmp.eq.s32.totalorder %s18, 3
    %p48 = por %p46, %p47
    %p49 = scmp.ne.s32.totalorder %s38, %s39
    %p50 = scmp.eq.s32.totalorder %s18, 0
    %p51 = por %p49, %p50
    %p52 = scmp.ne.s32.totalorder %s38, %s39
    %p53 = scmp.eq.s32.totalorder %s19, 3
    %p54 = por %p52, %p53
    %p56 = scmp.ne.s32.totalorder %s39, %s55
    %p57 = scmp.eq.s32.totalorder %s19, 0
    %p58 = por %p56, %p57
    %s59 = ssub.s32 %s21, %s28
    %p60 = scmp.eq.s32.totalorder %s59, 0
    %s62 = sadd.s32 %s61, 1
    %s63 = scalar_select %p60, %s61, %s62
    %p66 = pneg %p60
    %p67 = scmp.eq.s32.totalorder %s13, 3
    %p68 = por %p66, %p67
    %p69 = scmp.ne.s32.totalorder %s61, %s64
    %p70 = scmp.eq.s32.totalorder %s13, 0
    %p71 = por %p69, %p70
    %p72 = scmp.ne.s32.totalorder %s61, %s64
    %p73 = scmp.eq.s32.totalorder %s18, 3
    %p74 = por %p72, %p73
    %p75 = scmp.ne.s32.totalorder %s64, %s65
    %p76 = scmp.eq.s32.totalorder %s18, 0
    %p77 = por %p75, %p76
    %p78 = scmp.ne.s32.totalorder %s64, %s65
    %p79 = scmp.eq.s32.totalorder %s19, 3
    %p80 = por %p78, %p79
    %p82 = scmp.ne.s32.totalorder %s65, %s81
    %p83 = scmp.eq.s32.totalorder %s19, 0
    %p84 = por %p82, %p83
    %s85 = ssub.s32 %s21, %s28
    %p86 = scmp.eq.s32.totalorder %s85, 0
    %s88 = sadd.s32 %s87, 1
    %s89 = scalar_select %p86, %s87, %s88
    %p92 = pneg %p86
    %p93 = scmp.eq.s32.totalorder %s13, 3
    %p94 = por %p92, %p93
    %p95 = scmp.ne.s32.totalorder %s87, %s90
    %p96 = scmp.eq.s32.totalorder %s13, 0
    %p97 = por %p95, %p96
    %p98 = scmp.ne.s32.totalorder %s87, %s90
    %p99 = scmp.eq.s32.totalorder %s18, 3
    %p100 = por %p98, %p99
    %p101 = scmp.ne.s32.totalorder %s90, %s91
    %p102 = scmp.eq.s32.totalorder %s18, 0
    %p103 = por %p101, %p102
    %p104 = scmp.ne.s32.totalorder %s90, %s91
    %p105 = scmp.eq.s32.totalorder %s19, 3
    %p106 = por %p104, %p105
    %p108 = scmp.ne.s32.totalorder %s91, %s107
    %p109 = scmp.eq.s32.totalorder %s19, 0
    %p110 = por %p108, %p109
    %s111 = ssub.s32 %s21, %s28
    %p112 = scmp.eq.s32.totalorder %s111, 0
    %s114 = sadd.s32 %s113, 1
    %s115 = scalar_select %p112, %s113, %s114
    %p118 = pneg %p112
    %p119 = scmp.eq.s32.totalorder %s13, 3
    %p120 = por %p118, %p119
    %p121 = scmp.ne.s32.totalorder %s113, %s116
    %p122 = scmp.eq.s32.totalorder %s13, 0
    %p123 = por %p121, %p122
    %p124 = scmp.ne.s32.totalorder %s113, %s116
    %p125 = scmp.eq.s32.totalorder %s18, 3
    %p126 = por %p124, %p125
    %p127 = scmp.ne.s32.totalorder %s116, %s117
    %p128 = scmp.eq.s32.totalorder %s18, 0
    %p129 = por %p127, %p128
    %p130 = scmp.ne.s32.totalorder %s116, %s117
    %p131 = scmp.eq.s32.totalorder %s19, 3
    %p132 = por %p130, %p131
    %p134 = scmp.ne.s32.totalorder %s117, %s133
    %p135 = scmp.eq.s32.totalorder %s19, 0
    %p136 = por %p134, %p135
    %s137 = ssub.s32 %s21, %s28
    %p138 = scmp.eq.s32.totalorder %s137, 0
    %s140 = sadd.s32 %s139, 1
    %s141 = scalar_select %p138, %s139, %s140
    %p144 = pneg %p138
    %p145 = scmp.eq.s32.totalorder %s13, 3
    %p146 = por %p144, %p145
    %p147 = scmp.ne.s32.totalorder %s139, %s142
    %p148 = scmp.eq.s32.totalorder %s13, 0
    %p149 = por %p147, %p148
    %p150 = scmp.ne.s32.totalorder %s139, %s142
    %p151 = scmp.eq.s32.totalorder %s18, 3
    %p152 = por %p150, %p151
    %p153 = scmp.ne.s32.totalorder %s142, %s143
    %p154 = scmp.eq.s32.totalorder %s18, 0
    %p155 = por %p153, %p154
    %p156 = scmp.ne.s32.totalorder %s142, %s143
    %p157 = scmp.eq.s32.totalorder %s19, 3
    %p158 = por %p156, %p157
    %p160 = scmp.ne.s32.totalorder %s143, %s159
    %p161 = scmp.eq.s32.totalorder %s19, 0
    %p162 = por %p160, %p161
    %s163 = ssub.s32 %s21, %s28
    %p164 = scmp.eq.s32.totalorder %s163, 0
    %s166 = sadd.s32 %s165, 1
    %s167 = scalar_select %p164, %s165, %s166
    %p170 = pneg %p164
    %p171 = scmp.eq.s32.totalorder %s13, 3
    %p172 = por %p170, %p171
    %p173 = scmp.ne.s32.totalorder %s165, %s168
    %p174 = scmp.eq.s32.totalorder %s13, 0
    %p175 = por %p173, %p174
    %p176 = scmp.ne.s32.totalorder %s165, %s168
    %p177 = scmp.eq.s32.totalorder %s18, 3
    %p178 = por %p176, %p177
    %p179 = scmp.ne.s32.totalorder %s168, %s169
    %p180 = scmp.eq.s32.totalorder %s18, 0
    %p181 = por %p179, %p180
    %p182 = scmp.ne.s32.totalorder %s168, %s169
    %p183 = scmp.eq.s32.totalorder %s19, 3
    %p184 = por %p182, %p183
    %p186 = scmp.ne.s32.totalorder %s169, %s185
    %p187 = scmp.eq.s32.totalorder %s19, 0
    %p188 = por %p186, %p187
    %s189 = ssub.s32 %s21, %s28
    %p190 = scmp.eq.s32.totalorder %s189, 0
    %s192 = sadd.s32 %s191, 1
    %s193 = scalar_select %p190, %s191, %s192
    %p196 = pneg %p190
    %p197 = scmp.eq.s32.totalorder %s13, 3
    %p198 = por %p196, %p197
    %p199 = scmp.ne.s32.totalorder %s191, %s194
    %p200 = scmp.eq.s32.totalorder %s13, 0
    %p201 = por %p199, %p200
    %p202 = scmp.ne.s32.totalorder %s191, %s194
    %p203 = scmp.eq.s32.totalorder %s18, 3
    %p204 = por %p202, %p203
    %p205 = scmp.ne.s32.totalorder %s194, %s195
    %p206 = scmp.eq.s32.totalorder %s18, 0
    %p207 = por %p205, %p206
    %p208 = scmp.ne.s32.totalorder %s194, %s195
    %p209 = scmp.eq.s32.totalorder %s19, 3
    %p210 = por %p208, %p209
    %p212 = scmp.ne.s32.totalorder %s195, %s211
    %p213 = scmp.eq.s32.totalorder %s19, 0
    %p214 = por %p212, %p213
    %s215 = ssub.s32 %s20, %s32
    %p216 = scmp.eq.s32.totalorder %s215, 0
    %s218 = sadd.s32 %s217, 1
    %s219 = scalar_select %p216, %s217, %s218
    %p222 = pneg %p216
    %p223 = scmp.eq.s32.totalorder %s13, 3
    %p224 = por %p222, %p223
    %p225 = scmp.ne.s32.totalorder %s217, %s220
    %p226 = scmp.eq.s32.totalorder %s13, 0
    %p227 = por %p225, %p226
    %p228 = scmp.ne.s32.totalorder %s217, %s220
    %p229 = scmp.eq.s32.totalorder %s18, 3
    %p230 = por %p228, %p229
    %p231 = scmp.ne.s32.totalorder %s220, %s221
    %p232 = scmp.eq.s32.totalorder %s18, 0
    %p233 = por %p231, %p232
    %p234 = scmp.ne.s32.totalorder %s220, %s221
    %p235 = scmp.eq.s32.totalorder %s19, 3
    %p236 = por %p234, %p235
    %p238 = scmp.ne.s32.totalorder %s221, %s237
    %p239 = scmp.eq.s32.totalorder %s19, 0
    %p240 = por %p238, %p239
    %p241 = scmp.le.s32.totalorder 1, %s13
    %p242 = scmp.lt.s32.totalorder %s13, 5
    %p243 = pnand %p241, %p242
    %p244 = pneg %p243
    // Predicated region
    $region9: #{resblock_forward.1} parent=5 // pred_check
      _
    $region10: #{resblock_forward.1} parent=5 // pred_check_branch
      %246 = sbr.rel (%p243) target = $region12
    $region11: #{resblock_forward.1} parent=5 // pred_region
      %s247 = ssub.s32 %s13, 1
    $region12: #{resblock_forward.1} parent=5 // pred_fallthru
      _
    %p248 = scmp.lt.s32.totalorder %s13, 4
    // Predicated region
    $region13: #{resblock_forward.1} parent=5 // pred_check
      %p249 = pneg %p248
    $region14: #{resblock_forward.1} parent=5 // pred_check_branch
      %251 = sbr.rel (%p249) target = $region16
    $region15: #{resblock_forward.1} parent=5 // pred_region
      // Predicated region
      $region17: #{resblock_forward.1} parent=15 // pred_check
        %p252 = pneg %p45
      $region18: #{resblock_forward.1} parent=15 // pred_check_branch
        %254 = sbr.rel (%p252) target = $region20
      $region19: #{resblock_forward.1} parent=15 // pred_region
        %s255 = smul.u32 32, %s20
        %p256 = scmp.lt.s32.totalorder %s255, 63
        %s257 = scalar_select %p256, %s255, 63
        %s258 = smul.addr %s257, 8
        %s259 = scalar_lea.vmem %s0, %s258
        %s260 = smul.u32 32, %s20
      $region20: #{resblock_forward.1} parent=15 // pred_fallthru
        _
      // Predicated region
      $region21: #{resblock_forward.1} parent=15 // pred_check
        %p261 = pneg %p71
      $region22: #{resblock_forward.1} parent=15 // pred_check_branch
        %263 = sbr.rel (%p261) target = $region24
      $region23: #{resblock_forward.1} parent=15 // pred_region
        %p264 = scmp.lt.s32.totalorder %s21, 1
        %s265 = scalar_select %p264, %s21, 1
        %s266 = smul.addr %s265, 4
        %s267 = scalar_lea.vmem %s1, %s266
      $region24: #{resblock_forward.1} parent=15 // pred_fallthru
        _
      // Predicated region
      $region25: #{resblock_forward.1} parent=15 // pred_check
        %p268 = pneg %p97
      $region26: #{resblock_forward.1} parent=15 // pred_check_branch
        %270 = sbr.rel (%p268) target = $region28
      $region27: #{resblock_forward.1} parent=15 // pred_region
        %p271 = scmp.lt.s32.totalorder %s21, 1
        %s272 = scalar_select %p271, %s21, 1
        %s273 = scalar_lea.vmem %s2, %s272
      $region28: #{resblock_forward.1} parent=15 // pred_fallthru
        _
      // Predicated region
      $region29: #{resblock_forward.1} parent=15 // pred_check
        %p274 = pneg %p123
      $region30: #{resblock_forward.1} parent=15 // pred_check_branch
        %276 = sbr.rel (%p274) target = $region32
      $region31: #{resblock_forward.1} parent=15 // pred_region
        %p277 = scmp.lt.s32.totalorder %s21, 1
        %s278 = scalar_select %p277, %s21, 1
        %s279 = smul.addr %s278, 5
        %s280 = smul.addr %s279, 8
        %s281 = scalar_lea.vmem %s3, %s280
      $region32: #{resblock_forward.1} parent=15 // pred_fallthru
        _
      // Predicated region
      $region33: #{resblock_forward.1} parent=15 // pred_check
        %p282 = pneg %p149
      $region34: #{resblock_forward.1} parent=15 // pred_check_branch
        %284 = sbr.rel (%p282) target = $region36
      $region35: #{resblock_forward.1} parent=15 // pred_region
        %p285 = scmp.lt.s32.totalorder %s21, 1
        %s286 = scalar_select %p285, %s21, 1
        %s287 = scalar_lea.vmem %s4, %s286
      $region36: #{resblock_forward.1} parent=15 // pred_fallthru
        _
      // Predicated region
      $region37: #{resblock_forward.1} parent=15 // pred_check
        %p288 = pneg %p175
      $region38: #{resblock_forward.1} parent=15 // pred_check_branch
        %290 = sbr.rel (%p288) target = $region40
      $region39: #{resblock_forward.1} parent=15 // pred_region
        %p291 = scmp.lt.s32.totalorder %s21, 1
        %s292 = scalar_select %p291, %s21, 1
        %s293 = smul.addr %s292, 4
        %s294 = scalar_lea.vmem %s5, %s293
      $region40: #{resblock_forward.1} parent=15 // pred_fallthru
        _
      // Predicated region
      $region41: #{resblock_forward.1} parent=15 // pred_check
        %p295 = pneg %p201
      $region42: #{resblock_forward.1} parent=15 // pred_check_branch
        %297 = sbr.rel (%p295) target = $region44
      $region43: #{resblock_forward.1} parent=15 // pred_region
        %p298 = scmp.lt.s32.totalorder %s21, 1
        %s299 = scalar_select %p298, %s21, 1
        %s300 = scalar_lea.vmem %s6, %s299
      $region44: #{resblock_forward.1} parent=15 // pred_fallthru
        _
    $region16: #{resblock_forward.1} parent=5 // pred_fallthru
      _
    %p301 = scmp.le.s32.totalorder 1, %s13
    %p302 = scmp.lt.s32.totalorder %s13, 5
    %p303 = pnand %p301, %p302
    %p304 = pneg %p303
    // Predicated region
    $region45: #{resblock_forward.1} parent=5 // pred_check
      _
    $region46: #{resblock_forward.1} parent=5 // pred_check_branch
      %306 = sbr.rel (%p303) target = $region48
    $region47: #{resblock_forward.1} parent=5 // pred_region
      %s307 = ssub.s32 %s13, 1
      %s308 = smul.u32 32, %s22
      %p309 = scmp.lt.s32.totalorder %s308, 63
      %s310 = scalar_select %p309, %s308, 63
      %s311 = smul.addr %s310, 8
      %s312 = scalar_lea.vmem %s0, %s311
      %p313 = pneg %p51
      %p314 = pneg %p48
      %p315 = scmp.lt.s32.totalorder %s23, 1
      %s316 = scalar_select %p315, %s23, 1
      %s317 = smul.addr %s316, 4
      %s318 = scalar_lea.vmem %s1, %s317
      %p319 = pneg %p77
      %p320 = pneg %p74
      %p321 = scmp.lt.s32.totalorder %s23, 1
      %s322 = scalar_select %p321, %s23, 1
      %s323 = scalar_lea.vmem %s2, %s322
      %p324 = pneg %p103
      %p325 = pneg %p100
      %p326 = scmp.lt.s32.totalorder %s23, 1
      %s327 = scalar_select %p326, %s23, 1
      %s328 = smul.addr %s327, 5
      %s329 = smul.addr %s328, 8
      %s330 = scalar_lea.vmem %s3, %s329
      %p331 = pneg %p129
      %p332 = pneg %p126
      %p333 = scmp.lt.s32.totalorder %s23, 1
      %s334 = scalar_select %p333, %s23, 1
      %s335 = scalar_lea.vmem %s4, %s334
      %p336 = pneg %p155
      %p337 = pneg %p152
      %p338 = scmp.lt.s32.totalorder %s23, 1
      %s339 = scalar_select %p338, %s23, 1
      %s340 = smul.addr %s339, 4
      %s341 = scalar_lea.vmem %s5, %s340
      %p342 = pneg %p181
      %p343 = pneg %p178
      %p344 = scmp.lt.s32.totalorder %s23, 1
      %s345 = scalar_select %p344, %s23, 1
      %s346 = scalar_lea.vmem %s6, %s345
      %p347 = pneg %p207
      %p348 = pneg %p204
      %p349 = pneg %p233
      %p350 = pneg %p230
      %s351 = smul.u32 32, %s22
      %p352 = scmp.lt.s32.totalorder %s351, 63
      %s353 = scalar_select %p352, %s351, 63
      %s354 = smul.addr %s353, 8
      %s355 = scalar_lea.vmem %s7, %s354
      %s356 = smul.u32 32, %s22
      %p357 = scmp.lt.s32.totalorder %s356, 63
      %s358 = scalar_select %p357, %s356, 63
      %s359 = smul.addr %s358, 8
      %s360 = scalar_lea.vmem %s0, %s359
      %s361 = smul.u32 32, %s22
      %p362 = scmp.lt.s32.totalorder %s23, 1
      %s363 = scalar_select %p362, %s23, 1
      %s364 = smul.addr %s363, 4
      %s365 = scalar_lea.vmem %s1, %s364
      %p366 = scmp.lt.s32.totalorder %s23, 1
      %s367 = scalar_select %p366, %s23, 1
      %s368 = scalar_lea.vmem %s2, %s367
      %p369 = scmp.lt.s32.totalorder %s23, 1
      %s370 = scalar_select %p369, %s23, 1
      %s371 = smul.addr %s370, 5
      %s372 = smul.addr %s371, 8
      %s373 = scalar_lea.vmem %s3, %s372
      %p374 = scmp.lt.s32.totalorder %s23, 1
      %s375 = scalar_select %p374, %s23, 1
      %s376 = scalar_lea.vmem %s4, %s375
      %p377 = scmp.lt.s32.totalorder %s23, 1
      %s378 = scalar_select %p377, %s23, 1
      %s379 = smul.addr %s378, 4
      %s380 = scalar_lea.vmem %s5, %s379
      %p381 = scmp.lt.s32.totalorder %s23, 1
      %s382 = scalar_select %p381, %s23, 1
      %s383 = scalar_lea.vmem %s6, %s382
      %s384 = smul.u32 32, %s22
      %p385 = scmp.lt.s32.totalorder %s384, 63
      %s386 = scalar_select %p385, %s384, 63
      %s387 = smul.addr %s386, 8
      %s388 = scalar_lea.vmem %s7, %s387
      %s389 = smul.u32 32, %s22
      %p390 = scmp.eq.s32.totalorder %s23, 0
      // Predicated region
      $region49: #{resblock_forward.1} parent=47 // pred_check
        %p391 = pneg %p390
      $region50: #{resblock_forward.1} parent=47 // pred_check_branch
        %393 = sbr.rel (%p391) target = $region52
      $region51: #{resblock_forward.1} parent=47 // pred_region
        %vm394 = vcmask 31744
        %395 = vst.msk [vmem:[#allocation2] sm:$0xff] %vm394, 0.0
        %396 = vst.msk [vmem:[#allocation2 + $0x8] sm:$0xff] %vm394, 0.0
        %vm397 = vcmask 25600
        %398 = vst.msk [vmem:[#allocation2 + $0x10] sm:$0x3] %vm397, 0.0
        %399 = vst.msk [vmem:[#allocation2 + $0x18] sm:$0xff] %vm394, 0.0
        %400 = vst.msk [vmem:[#allocation2 + $0x20] sm:$0xff] %vm394, 0.0
        %401 = vst.msk [vmem:[#allocation2 + $0x28] sm:$0x3] %vm397, 0.0
        %402 = vst.msk [vmem:[#allocation2 + $0x30] sm:$0xff] %vm394, 0.0
        %403 = vst.msk [vmem:[#allocation2 + $0x38] sm:$0xff] %vm394, 0.0
        %404 = vst.msk [vmem:[#allocation2 + $0x40] sm:$0x3] %vm397, 0.0
        %405 = vst.msk [vmem:[#allocation2 + $0x48] sm:$0xff] %vm394, 0.0
        %406 = vst.msk [vmem:[#allocation2 + $0x50] sm:$0xff] %vm394, 0.0
        %407 = vst.msk [vmem:[#allocation2 + $0x58] sm:$0x3] %vm397, 0.0
        %408 = vst.msk [vmem:[#allocation2 + $0x60] sm:$0xff] %vm394, 0.0
        %409 = vst.msk [vmem:[#allocation2 + $0x68] sm:$0xff] %vm394, 0.0
        %410 = vst.msk [vmem:[#allocation2 + $0x70] sm:$0x3] %vm397, 0.0
        %411 = vst.msk [vmem:[#allocation2 + $0x78] sm:$0xff] %vm394, 0.0
        %412 = vst.msk [vmem:[#allocation2 + $0x80] sm:$0xff] %vm394, 0.0
        %413 = vst.msk [vmem:[#allocation2 + $0x88] sm:$0x3] %vm397, 0.0
        %414 = vst.msk [vmem:[#allocation2 + $0x90] sm:$0xff] %vm394, 0.0
        %415 = vst.msk [vmem:[#allocation2 + $0x98] sm:$0xff] %vm394, 0.0
        %416 = vst.msk [vmem:[#allocation2 + $0xa0] sm:$0x3] %vm397, 0.0
        %417 = vst.msk [vmem:[#allocation2 + $0xa8] sm:$0xff] %vm394, 0.0
        %418 = vst.msk [vmem:[#allocation2 + $0xb0] sm:$0xff] %vm394, 0.0
        %419 = vst.msk [vmem:[#allocation2 + $0xb8] sm:$0x3] %vm397, 0.0
        %420 = vst.msk [vmem:[#allocation2 + $0xc0] sm:$0xff] %vm394, 0.0
        %421 = vst.msk [vmem:[#allocation2 + $0xc8] sm:$0xff] %vm394, 0.0
        %422 = vst.msk [vmem:[#allocation2 + $0xd0] sm:$0x3] %vm397, 0.0
        %423 = vst.msk [vmem:[#allocation2 + $0xd8] sm:$0xff] %vm394, 0.0
        %424 = vst.msk [vmem:[#allocation2 + $0xe0] sm:$0xff] %vm394, 0.0
        %425 = vst.msk [vmem:[#allocation2 + $0xe8] sm:$0x3] %vm397, 0.0
        %426 = vst.msk [vmem:[#allocation2 + $0xf0] sm:$0xff] %vm394, 0.0
        %427 = vst.msk [vmem:[#allocation2 + $0xf8] sm:$0xff] %vm394, 0.0
        %428 = vst.msk [vmem:[#allocation2 + $0x100] sm:$0x3] %vm397, 0.0
        %429 = vst.msk [vmem:[#allocation2 + $0x108] sm:$0xff] %vm394, 0.0
        %430 = vst.msk [vmem:[#allocation2 + $0x110] sm:$0xff] %vm394, 0.0
        %431 = vst.msk [vmem:[#allocation2 + $0x118] sm:$0x3] %vm397, 0.0
        %432 = vst.msk [vmem:[#allocation2 + $0x120] sm:$0xff] %vm394, 0.0
        %433 = vst.msk [vmem:[#allocation2 + $0x128] sm:$0xff] %vm394, 0.0
        %434 = vst.msk [vmem:[#allocation2 + $0x130] sm:$0x3] %vm397, 0.0
        %435 = vst.msk [vmem:[#allocation2 + $0x138] sm:$0xff] %vm394, 0.0
        %436 = vst.msk [vmem:[#allocation2 + $0x140] sm:$0xff] %vm394, 0.0
        %437 = vst.msk [vmem:[#allocation2 + $0x148] sm:$0x3] %vm397, 0.0
        %438 = vst.msk [vmem:[#allocation2 + $0x150] sm:$0xff] %vm394, 0.0
        %439 = vst.msk [vmem:[#allocation2 + $0x158] sm:$0xff] %vm394, 0.0
        %440 = vst.msk [vmem:[#allocation2 + $0x160] sm:$0x3] %vm397, 0.0
        %441 = vst.msk [vmem:[#allocation2 + $0x168] sm:$0xff] %vm394, 0.0
        %442 = vst.msk [vmem:[#allocation2 + $0x170] sm:$0xff] %vm394, 0.0
        %443 = vst.msk [vmem:[#allocation2 + $0x178] sm:$0x3] %vm397, 0.0
        %444 = vst.msk [vmem:[#allocation2 + $0x180] sm:$0xff] %vm394, 0.0
        %445 = vst.msk [vmem:[#allocation2 + $0x188] sm:$0xff] %vm394, 0.0
        %446 = vst.msk [vmem:[#allocation2 + $0x190] sm:$0x3] %vm397, 0.0
        %447 = vst.msk [vmem:[#allocation2 + $0x198] sm:$0xff] %vm394, 0.0
        %448 = vst.msk [vmem:[#allocation2 + $0x1a0] sm:$0xff] %vm394, 0.0
        %449 = vst.msk [vmem:[#allocation2 + $0x1a8] sm:$0x3] %vm397, 0.0
        %v450 = vld [vmem:[%s360] sm:$0xff]
        %v451 = vld [vmem:[%s360 + $0x8] sm:$0xff]
        %v452 = vld [vmem:[%s360 + $0x10] sm:$0xff]
        %v453 = vld [vmem:[%s360 + $0x18] sm:$0xff]
        %v454 = vld [vmem:[%s360 + $0x20] sm:$0xff]
        %v455 = vld [vmem:[%s360 + $0x28] sm:$0xff]
        %v456 = vld [vmem:[%s360 + $0x30] sm:$0xff]
        %v457 = vld [vmem:[%s360 + $0x38] sm:$0xff]
        %v458 = vld [vmem:[%s360 + $0x40] sm:$0xff]
        %v459 = vld [vmem:[%s360 + $0x48] sm:$0xff]
        %v460 = vld [vmem:[%s360 + $0x50] sm:$0xff]
        %v461 = vld [vmem:[%s360 + $0x58] sm:$0xff]
        %v462 = vld [vmem:[%s360 + $0x60] sm:$0xff]
        %v463 = vld [vmem:[%s360 + $0x68] sm:$0xff]
        %v464 = vld [vmem:[%s360 + $0x70] sm:$0xff]
        %v465 = vld [vmem:[%s360 + $0x78] sm:$0xff]
        %v466 = vld [vmem:[%s360 + $0x80] sm:$0xff]
        %v467 = vld [vmem:[%s360 + $0x88] sm:$0xff]
        %v468 = vld [vmem:[%s360 + $0x90] sm:$0xff]
        %v469 = vld [vmem:[%s360 + $0x98] sm:$0xff]
        %v470 = vld [vmem:[%s360 + $0xa0] sm:$0xff]
        %v471 = vld [vmem:[%s360 + $0xa8] sm:$0xff]
        %v472 = vld [vmem:[%s360 + $0xb0] sm:$0xff]
        %v473 = vld [vmem:[%s360 + $0xb8] sm:$0xff]
        %v474 = vld [vmem:[%s360 + $0xc0] sm:$0xff]
        %v475 = vld [vmem:[%s360 + $0xc8] sm:$0xff]
        %v476 = vld [vmem:[%s360 + $0xd0] sm:$0xff]
        %v477 = vld [vmem:[%s360 + $0xd8] sm:$0xff]
        %v478 = vld [vmem:[%s360 + $0xe0] sm:$0xff]
        %v479 = vld [vmem:[%s360 + $0xe8] sm:$0xff]
        %v480 = vld [vmem:[%s360 + $0xf0] sm:$0xff]
        %v481 = vld [vmem:[%s360 + $0xf8] sm:$0xff]
        %482 = vst.msk [vmem:[%s388] sm:$0xff] %vm394, %v450
        %483 = vst.msk [vmem:[%s388 + $0x8] sm:$0xff] %vm394, %v451
        %484 = vst.msk [vmem:[%s388 + $0x10] sm:$0xff] %vm394, %v452
        %485 = vst.msk [vmem:[%s388 + $0x18] sm:$0xff] %vm394, %v453
        %486 = vst.msk [vmem:[%s388 + $0x20] sm:$0xff] %vm394, %v454
        %487 = vst.msk [vmem:[%s388 + $0x28] sm:$0xff] %vm394, %v455
        %488 = vst.msk [vmem:[%s388 + $0x30] sm:$0xff] %vm394, %v456
        %489 = vst.msk [vmem:[%s388 + $0x38] sm:$0xff] %vm394, %v457
        %490 = vst.msk [vmem:[%s388 + $0x40] sm:$0xff] %vm394, %v458
        %491 = vst.msk [vmem:[%s388 + $0x48] sm:$0xff] %vm394, %v459
        %492 = vst.msk [vmem:[%s388 + $0x50] sm:$0xff] %vm394, %v460
        %493 = vst.msk [vmem:[%s388 + $0x58] sm:$0xff] %vm394, %v461
        %494 = vst.msk [vmem:[%s388 + $0x60] sm:$0xff] %vm394, %v462
        %495 = vst.msk [vmem:[%s388 + $0x68] sm:$0xff] %vm394, %v463
        %496 = vst.msk [vmem:[%s388 + $0x70] sm:$0xff] %vm394, %v464
        %497 = vst.msk [vmem:[%s388 + $0x78] sm:$0xff] %vm394, %v465
        %498 = vst.msk [vmem:[%s388 + $0x80] sm:$0xff] %vm394, %v466
        %499 = vst.msk [vmem:[%s388 + $0x88] sm:$0xff] %vm394, %v467
        %500 = vst.msk [vmem:[%s388 + $0x90] sm:$0xff] %vm394, %v468
        %501 = vst.msk [vmem:[%s388 + $0x98] sm:$0xff] %vm394, %v469
        %502 = vst.msk [vmem:[%s388 + $0xa0] sm:$0xff] %vm394, %v470
        %503 = vst.msk [vmem:[%s388 + $0xa8] sm:$0xff] %vm394, %v471
        %504 = vst.msk [vmem:[%s388 + $0xb0] sm:$0xff] %vm394, %v472
        %505 = vst.msk [vmem:[%s388 + $0xb8] sm:$0xff] %vm394, %v473
        %506 = vst.msk [vmem:[%s388 + $0xc0] sm:$0xff] %vm394, %v474
        %507 = vst.msk [vmem:[%s388 + $0xc8] sm:$0xff] %vm394, %v475
        %508 = vst.msk [vmem:[%s388 + $0xd0] sm:$0xff] %vm394, %v476
        %509 = vst.msk [vmem:[%s388 + $0xd8] sm:$0xff] %vm394, %v477
        %510 = vst.msk [vmem:[%s388 + $0xe0] sm:$0xff] %vm394, %v478
        %511 = vst.msk [vmem:[%s388 + $0xe8] sm:$0xff] %vm394, %v479
        %512 = vst.msk [vmem:[%s388 + $0xf0] sm:$0xff] %vm394, %v480
        %513 = vst.msk [vmem:[%s388 + $0xf8] sm:$0xff] %vm394, %v481
      $region52: #{resblock_forward.1} parent=47 // pred_fallthru
        _
      %v514 = vld [vmem:[%s388] sm:$0xff]
      %v515 = vld [vmem:[%s388 + $0x8] sm:$0xff]
      %v516 = vld [vmem:[%s388 + $0x10] sm:$0xff]
      %v517 = vld [vmem:[%s388 + $0x18] sm:$0xff]
      %v518 = vld [vmem:[%s388 + $0x20] sm:$0xff]
      %v519 = vld [vmem:[%s388 + $0x28] sm:$0xff]
      %v520 = vld [vmem:[%s388 + $0x30] sm:$0xff]
      %v521 = vld [vmem:[%s388 + $0x38] sm:$0xff]
      %v522 = vld [vmem:[%s388 + $0x40] sm:$0xff]
      %v523 = vld [vmem:[%s388 + $0x48] sm:$0xff]
      %v524 = vld [vmem:[%s388 + $0x50] sm:$0xff]
      %v525 = vld [vmem:[%s388 + $0x58] sm:$0xff]
      %v526 = vld [vmem:[%s388 + $0x60] sm:$0xff]
      %v527 = vld [vmem:[%s388 + $0x68] sm:$0xff]
      %v528 = vld [vmem:[%s388 + $0x70] sm:$0xff]
      %v529 = vld [vmem:[%s388 + $0x78] sm:$0xff]
      %v530 = vld [vmem:[%s388 + $0x80] sm:$0xff]
      %v531 = vld [vmem:[%s388 + $0x88] sm:$0xff]
      %v532 = vld [vmem:[%s388 + $0x90] sm:$0xff]
      %v533 = vld [vmem:[%s388 + $0x98] sm:$0xff]
      %v534 = vld [vmem:[%s388 + $0xa0] sm:$0xff]
      %v535 = vld [vmem:[%s388 + $0xa8] sm:$0xff]
      %v536 = vld [vmem:[%s388 + $0xb0] sm:$0xff]
      %v537 = vld [vmem:[%s388 + $0xb8] sm:$0xff]
      %v538 = vld [vmem:[%s388 + $0xc0] sm:$0xff]
      %v539 = vld [vmem:[%s388 + $0xc8] sm:$0xff]
      %v540 = vld [vmem:[%s388 + $0xd0] sm:$0xff]
      %v541 = vld [vmem:[%s388 + $0xd8] sm:$0xff]
      %v542 = vld [vmem:[%s388 + $0xe0] sm:$0xff]
      %v543 = vld [vmem:[%s388 + $0xe8] sm:$0xff]
      %v544 = vld [vmem:[%s388 + $0xf0] sm:$0xff]
      %v545 = vld [vmem:[%s388 + $0xf8] sm:$0xff]
      %v546 = vld [vmem:[%s365] sm:$0xf]
      %v547 = vld [vmem:[%s368] sm:$0x1]
      %v549 = vlaneseq
      %v550 = vshrl.u32 %v549, 7
      %v551 = vsub.s32 0, %v550
      %v552 = vrot.slane %v547, %v551
      %vm554 = vcmask 31744
      %v556 = vsel %vm554, %v514, 0
      %v559 = vsel %vm554, %v515, 0
      %v562 = vsel %vm554, %v516, 0
      %v565 = vsel %vm554, %v517, 0
      %v568 = vsel %vm554, %v518, 0
      %v571 = vsel %vm554, %v519, 0
      %v574 = vsel %vm554, %v520, 0
      %v577 = vsel %vm554, %v521, 0
      %v580 = vsel %vm554, %v522, 0
      %v583 = vsel %vm554, %v523, 0
      %v586 = vsel %vm554, %v524, 0
      %v589 = vsel %vm554, %v525, 0
      %v592 = vsel %vm554, %v526, 0
      %v595 = vsel %vm554, %v527, 0
      %v598 = vsel %vm554, %v528, 0
      %v601 = vsel %vm554, %v529, 0
      %v604 = vsel %vm554, %v530, 0
      %v607 = vsel %vm554, %v531, 0
      %v610 = vsel %vm554, %v532, 0
      %v613 = vsel %vm554, %v533, 0
      %v616 = vsel %vm554, %v534, 0
      %v619 = vsel %vm554, %v535, 0
      %v622 = vsel %vm554, %v536, 0
      %v625 = vsel %vm554, %v537, 0
      %v628 = vsel %vm554, %v538, 0
      %v631 = vsel %vm554, %v539, 0
      %v634 = vsel %vm554, %v540, 0
      %v637 = vsel %vm554, %v541, 0
      %v640 = vsel %vm554, %v542, 0
      %v643 = vsel %vm554, %v543, 0
      %v646 = vsel %vm554, %v544, 0
      %v649 = vsel %vm554, %v545, 0
      %vm651 = vcmask 1043456
      %v653 = vsel %vm651, %v546, 0
      %655 = vmatprep.subr.mxu0 0.0
      %656 = vmatpush1.msra.mxu0 0.0
      %657 = vmatprep.subr.mxu0 0.0
      %658 = vmatpush1.msra.mxu0 0.0
      %659 = vmatprep.subr.mxu0 0.0
      %660 = vmatpush1.msra.mxu0 0.0
      %661 = vmatprep.subr.mxu0 0.0
      %662 = vmatpush1.msra.mxu0 0.0
      %663 = vmatprep.subr.mxu0 0.0
      %664 = vmatpush1.msra.mxu0 0.0
      %665 = vmatprep.subr.mxu0 0.0
      %666 = vmatpush1.msra.mxu0 0.0
      %667 = vmatprep.subr.mxu0 0.0
      %668 = vmatpush1.msra.mxu0 0.0
      %669 = vmatprep.subr.mxu0 0.0
      %670 = vmatpush1.msra.mxu0 0.0
      %671 = vmatprep.subr.mxu0 0.0
      %672 = vmatpush1.msra.mxu0 0.0
      %673 = vmatprep.subr.mxu0 0.0
      %674 = vmatpush1.msra.mxu0 0.0
      %675 = vmatprep.subr.mxu0 0.0
      %676 = vmatpush1.msra.mxu0 0.0
      %677 = vmatprep.subr.mxu0 0.0
      %678 = vmatpush1.msra.mxu0 0.0
      %679 = vmatprep.subr.mxu0 0.0
      %680 = vmatpush1.msra.mxu0 0.0
      %681 = vmatprep.subr.mxu0 0.0
      %682 = vmatpush1.msra.mxu0 0.0
      %683 = vmatprep.subr.mxu0 0.0
      %684 = vmatpush1.msra.mxu0 0.0
      %685 = vmatprep.subr.mxu0 0.0
      %686 = vmatpush1.msra.mxu0 %v653
      %687 = vmatprep.subr.mxu0 0.0
      %688 = vmatpush2.msra.mxu0 0.0
      %689 = vmatprep.subr.mxu0 0.0
      %690 = vmatpush2.msra.mxu0 0.0
      %691 = vmatprep.subr.mxu0 0.0
      %692 = vmatpush2.msra.mxu0 0.0
      %693 = vmatprep.subr.mxu0 0.0
      %694 = vmatpush2.msra.mxu0 0.0
      %695 = vmatprep.subr.mxu0 0.0
      %696 = vmatpush2.msra.mxu0 0.0
      %697 = vmatprep.subr.mxu0 0.0
      %698 = vmatpush2.msra.mxu0 0.0
      %699 = vmatprep.subr.mxu0 0.0
      %700 = vmatpush2.msra.mxu0 0.0
      %701 = vmatprep.subr.mxu0 0.0
      %702 = vmatpush2.msra.mxu0 0.0
      %703 = vmatprep.subr.mxu0 0.0
      %704 = vmatpush2.msra.mxu0 0.0
      %705 = vmatprep.subr.mxu0 0.0
      %706 = vmatpush2.msra.mxu0 0.0
      %707 = vmatprep.subr.mxu0 0.0
      %708 = vmatpush2.msra.mxu0 0.0
      %709 = vmatprep.subr.mxu0 0.0
      %710 = vmatpush2.msra.mxu0 0.0
      %711 = vmatprep.subr.mxu0 0.0
      %712 = vmatpush2.msra.mxu0 0.0
      %713 = vmatprep.subr.mxu0 0.0
      %714 = vmatpush2.msra.mxu0 0.0
      %715 = vmatprep.subr.mxu0 0.0
      %716 = vmatpush2.msra.mxu0 0.0
      %717 = vmatprep.subr.mxu0 0.0
      %718 = vmatpush2.msra.mxu0 0.0
      %719 = vmatprep.mubr.f32.mxu0 0.0
      %720 = vmatmul.mubr.f32.gmra.mxu0 %v556
      %v721 = vpop.f32.mrf.mxu0
      %v722 = vadd.f32 %v552, %v721
      %v723 = vpop.f32.mrf.mxu0
      %724 = vmatprep.mubr.f32.mxu0 0.0
      %725 = vmatmul.mubr.f32.gmra.mxu0 %v559
      %v726 = vpop.f32.mrf.mxu0
      %v727 = vadd.f32 %v552, %v726
      %v728 = vpop.f32.mrf.mxu0
      %729 = vmatprep.mubr.f32.mxu0 0.0
      %730 = vmatmul.mubr.f32.gmra.mxu0 %v562
      %v731 = vpop.f32.mrf.mxu0
      %v732 = vadd.f32 %v552, %v731
      %v733 = vpop.f32.mrf.mxu0
      %734 = vmatprep.mubr.f32.mxu0 0.0
      %735 = vmatmul.mubr.f32.gmra.mxu0 %v565
      %v736 = vpop.f32.mrf.mxu0
      %v737 = vadd.f32 %v552, %v736
      %v738 = vpop.f32.mrf.mxu0
      %739 = vmatprep.mubr.f32.mxu0 0.0
      %740 = vmatmul.mubr.f32.gmra.mxu0 %v568
      %v741 = vpop.f32.mrf.mxu0
      %v742 = vadd.f32 %v552, %v741
      %v743 = vpop.f32.mrf.mxu0
      %744 = vmatprep.mubr.f32.mxu0 0.0
      %745 = vmatmul.mubr.f32.gmra.mxu0 %v571
      %v746 = vpop.f32.mrf.mxu0
      %v747 = vadd.f32 %v552, %v746
      %v748 = vpop.f32.mrf.mxu0
      %749 = vmatprep.mubr.f32.mxu0 0.0
      %750 = vmatmul.mubr.f32.gmra.mxu0 %v574
      %v751 = vpop.f32.mrf.mxu0
      %v752 = vadd.f32 %v552, %v751
      %v753 = vpop.f32.mrf.mxu0
      %754 = vmatprep.mubr.f32.mxu0 0.0
      %755 = vmatmul.mubr.f32.gmra.mxu0 %v577
      %v756 = vpop.f32.mrf.mxu0
      %v757 = vadd.f32 %v552, %v756
      %v758 = vpop.f32.mrf.mxu0
      %759 = vmatprep.mubr.f32.mxu0 0.0
      %760 = vmatmul.mubr.f32.gmra.mxu0 %v580
      %v761 = vpop.f32.mrf.mxu0
      %v762 = vadd.f32 %v552, %v761
      %v763 = vpop.f32.mrf.mxu0
      %764 = vmatprep.mubr.f32.mxu0 0.0
      %765 = vmatmul.mubr.f32.gmra.mxu0 %v583
      %v766 = vpop.f32.mrf.mxu0
      %v767 = vadd.f32 %v552, %v766
      %v768 = vpop.f32.mrf.mxu0
      %769 = vmatprep.mubr.f32.mxu0 0.0
      %770 = vmatmul.mubr.f32.gmra.mxu0 %v586
      %v771 = vpop.f32.mrf.mxu0
      %v772 = vadd.f32 %v552, %v771
      %v773 = vpop.f32.mrf.mxu0
      %774 = vmatprep.mubr.f32.mxu0 0.0
      %775 = vmatmul.mubr.f32.gmra.mxu0 %v589
      %v776 = vpop.f32.mrf.mxu0
      %v777 = vadd.f32 %v552, %v776
      %v778 = vpop.f32.mrf.mxu0
      %779 = vmatprep.mubr.f32.mxu0 0.0
      %780 = vmatmul.mubr.f32.gmra.mxu0 %v592
      %v781 = vpop.f32.mrf.mxu0
      %v782 = vadd.f32 %v552, %v781
      %v783 = vpop.f32.mrf.mxu0
      %784 = vmatprep.mubr.f32.mxu0 0.0
      %785 = vmatmul.mubr.f32.gmra.mxu0 %v595
      %v786 = vpop.f32.mrf.mxu0
      %v787 = vadd.f32 %v552, %v786
      %v788 = vpop.f32.mrf.mxu0
      %789 = vmatprep.mubr.f32.mxu0 0.0
      %790 = vmatmul.mubr.f32.gmra.mxu0 %v598
      %v791 = vpop.f32.mrf.mxu0
      %v792 = vadd.f32 %v552, %v791
      %v793 = vpop.f32.mrf.mxu0
      %794 = vmatprep.mubr.f32.mxu0 0.0
      %795 = vmatmul.mubr.f32.gmra.mxu0 %v601
      %v796 = vpop.f32.mrf.mxu0
      %v797 = vadd.f32 %v552, %v796
      %v798 = vpop.f32.mrf.mxu0
      %799 = vmatprep.mubr.f32.mxu0 0.0
      %800 = vmatmul.mubr.f32.gmra.mxu0 %v604
      %v801 = vpop.f32.mrf.mxu0
      %v802 = vadd.f32 %v552, %v801
      %v803 = vpop.f32.mrf.mxu0
      %804 = vmatprep.mubr.f32.mxu0 0.0
      %805 = vmatmul.mubr.f32.gmra.mxu0 %v607
      %v806 = vpop.f32.mrf.mxu0
      %v807 = vadd.f32 %v552, %v806
      %v808 = vpop.f32.mrf.mxu0
      %809 = vmatprep.mubr.f32.mxu0 0.0
      %810 = vmatmul.mubr.f32.gmra.mxu0 %v610
      %v811 = vpop.f32.mrf.mxu0
      %v812 = vadd.f32 %v552, %v811
      %v813 = vpop.f32.mrf.mxu0
      %814 = vmatprep.mubr.f32.mxu0 0.0
      %815 = vmatmul.mubr.f32.gmra.mxu0 %v613
      %v816 = vpop.f32.mrf.mxu0
      %v817 = vadd.f32 %v552, %v816
      %v818 = vpop.f32.mrf.mxu0
      %819 = vmatprep.mubr.f32.mxu0 0.0
      %820 = vmatmul.mubr.f32.gmra.mxu0 %v616
      %v821 = vpop.f32.mrf.mxu0
      %v822 = vadd.f32 %v552, %v821
      %v823 = vpop.f32.mrf.mxu0
      %824 = vmatprep.mubr.f32.mxu0 0.0
      %825 = vmatmul.mubr.f32.gmra.mxu0 %v619
      %v826 = vpop.f32.mrf.mxu0
      %v827 = vadd.f32 %v552, %v826
      %v828 = vpop.f32.mrf.mxu0
      %829 = vmatprep.mubr.f32.mxu0 0.0
      %830 = vmatmul.mubr.f32.gmra.mxu0 %v622
      %v831 = vpop.f32.mrf.mxu0
      %v832 = vadd.f32 %v552, %v831
      %v833 = vpop.f32.mrf.mxu0
      %834 = vmatprep.mubr.f32.mxu0 0.0
      %835 = vmatmul.mubr.f32.gmra.mxu0 %v625
      %v836 = vpop.f32.mrf.mxu0
      %v837 = vadd.f32 %v552, %v836
      %v838 = vpop.f32.mrf.mxu0
      %839 = vmatprep.mubr.f32.mxu0 0.0
      %840 = vmatmul.mubr.f32.gmra.mxu0 %v628
      %v841 = vpop.f32.mrf.mxu0
      %v842 = vadd.f32 %v552, %v841
      %v843 = vpop.f32.mrf.mxu0
      %844 = vmatprep.mubr.f32.mxu0 0.0
      %845 = vmatmul.mubr.f32.gmra.mxu0 %v631
      %v846 = vpop.f32.mrf.mxu0
      %v847 = vadd.f32 %v552, %v846
      %v848 = vpop.f32.mrf.mxu0
      %849 = vmatprep.mubr.f32.mxu0 0.0
      %850 = vmatmul.mubr.f32.gmra.mxu0 %v634
      %v851 = vpop.f32.mrf.mxu0
      %v852 = vadd.f32 %v552, %v851
      %v853 = vpop.f32.mrf.mxu0
      %854 = vmatprep.mubr.f32.mxu0 0.0
      %855 = vmatmul.mubr.f32.gmra.mxu0 %v637
      %v856 = vpop.f32.mrf.mxu0
      %v857 = vadd.f32 %v552, %v856
      %v858 = vpop.f32.mrf.mxu0
      %859 = vmatprep.mubr.f32.mxu0 0.0
      %860 = vmatmul.mubr.f32.gmra.mxu0 %v640
      %v861 = vpop.f32.mrf.mxu0
      %v862 = vadd.f32 %v552, %v861
      %v863 = vpop.f32.mrf.mxu0
      %864 = vmatprep.mubr.f32.mxu0 0.0
      %865 = vmatmul.mubr.f32.gmra.mxu0 %v643
      %v866 = vpop.f32.mrf.mxu0
      %v867 = vadd.f32 %v552, %v866
      %v868 = vpop.f32.mrf.mxu0
      %869 = vmatprep.mubr.f32.mxu0 0.0
      %870 = vmatmul.mubr.f32.gmra.mxu0 %v646
      %v871 = vpop.f32.mrf.mxu0
      %v872 = vadd.f32 %v552, %v871
      %v873 = vpop.f32.mrf.mxu0
      %874 = vmatprep.mubr.f32.mxu0 0.0
      %875 = vmatmul.mubr.f32.gmra.mxu0 %v649
      %v876 = vpop.f32.mrf.mxu0
      %v877 = vadd.f32 %v552, %v876
      %v878 = vpop.f32.mrf.mxu0
      %879 = vdwg.mxu0
      %s880 = scalar_lea.vmem [#allocation2], 24
      %881 = vst.msk [vmem:[%s880 + $0x1] sm:$0xff] %vm554, %v722
      %882 = vst.msk [vmem:[%s880 + $0x9] sm:$0xff] %vm554, %v727
      %883 = vst.msk [vmem:[%s880 + $0x19] sm:$0xff] %vm554, %v732
      %884 = vst.msk [vmem:[%s880 + $0x21] sm:$0xff] %vm554, %v737
      %885 = vst.msk [vmem:[%s880 + $0x31] sm:$0xff] %vm554, %v742
      %886 = vst.msk [vmem:[%s880 + $0x39] sm:$0xff] %vm554, %v747
      %887 = vst.msk [vmem:[%s880 + $0x49] sm:$0xff] %vm554, %v752
      %888 = vst.msk [vmem:[%s880 + $0x51] sm:$0xff] %vm554, %v757
      %889 = vst.msk [vmem:[%s880 + $0x61] sm:$0xff] %vm554, %v762
      %890 = vst.msk [vmem:[%s880 + $0x69] sm:$0xff] %vm554, %v767
      %891 = vst.msk [vmem:[%s880 + $0x79] sm:$0xff] %vm554, %v772
      %892 = vst.msk [vmem:[%s880 + $0x81] sm:$0xff] %vm554, %v777
      %893 = vst.msk [vmem:[%s880 + $0x91] sm:$0xff] %vm554, %v782
      %894 = vst.msk [vmem:[%s880 + $0x99] sm:$0xff] %vm554, %v787
      %895 = vst.msk [vmem:[%s880 + $0xa9] sm:$0xff] %vm554, %v792
      %896 = vst.msk [vmem:[%s880 + $0xb1] sm:$0xff] %vm554, %v797
      %897 = vst.msk [vmem:[%s880 + $0xc1] sm:$0xff] %vm554, %v802
      %898 = vst.msk [vmem:[%s880 + $0xc9] sm:$0xff] %vm554, %v807
      %899 = vst.msk [vmem:[%s880 + $0xd9] sm:$0xff] %vm554, %v812
      %900 = vst.msk [vmem:[%s880 + $0xe1] sm:$0xff] %vm554, %v817
      %901 = vst.msk [vmem:[%s880 + $0xf1] sm:$0xff] %vm554, %v822
      %902 = vst.msk [vmem:[%s880 + $0xf9] sm:$0xff] %vm554, %v827
      %903 = vst.msk [vmem:[%s880 + $0x109] sm:$0xff] %vm554, %v832
      %904 = vst.msk [vmem:[%s880 + $0x111] sm:$0xff] %vm554, %v837
      %905 = vst.msk [vmem:[%s880 + $0x121] sm:$0xff] %vm554, %v842
      %906 = vst.msk [vmem:[%s880 + $0x129] sm:$0xff] %vm554, %v847
      %907 = vst.msk [vmem:[%s880 + $0x139] sm:$0xff] %vm554, %v852
      %908 = vst.msk [vmem:[%s880 + $0x141] sm:$0xff] %vm554, %v857
      %909 = vst.msk [vmem:[%s880 + $0x151] sm:$0xff] %vm554, %v862
      %910 = vst.msk [vmem:[%s880 + $0x159] sm:$0xff] %vm554, %v867
      %911 = vst.msk [vmem:[%s880 + $0x169] sm:$0xff] %vm554, %v872
      %912 = vst.msk [vmem:[%s880 + $0x171] sm:$0xff] %vm554, %v877
      %v913 = vld [vmem:[#allocation2] sm:$0xff]
      %v914 = vld [vmem:[#allocation2 + $0x8] sm:$0xff]
      %v915 = vld [vmem:[#allocation2 + $0x18] sm:$0xff]
      %v916 = vld [vmem:[#allocation2 + $0x20] sm:$0xff]
      %v917 = vld [vmem:[#allocation2 + $0x30] sm:$0xff]
      %v918 = vld [vmem:[#allocation2 + $0x38] sm:$0xff]
      %v919 = vld [vmem:[#allocation2 + $0x48] sm:$0xff]
      %v920 = vld [vmem:[#allocation2 + $0x50] sm:$0xff]
      %v921 = vld [vmem:[#allocation2 + $0x60] sm:$0xff]
      %v922 = vld [vmem:[#allocation2 + $0x68] sm:$0xff]
      %v923 = vld [vmem:[#allocation2 + $0x78] sm:$0xff]
      %v924 = vld [vmem:[#allocation2 + $0x80] sm:$0xff]
      %v925 = vld [vmem:[#allocation2 + $0x90] sm:$0xff]
      %v926 = vld [vmem:[#allocation2 + $0x98] sm:$0xff]
      %v927 = vld [vmem:[#allocation2 + $0xa8] sm:$0xff]
      %v928 = vld [vmem:[#allocation2 + $0xb0] sm:$0xff]
      %v929 = vld [vmem:[#allocation2 + $0xc0] sm:$0xff]
      %v930 = vld [vmem:[#allocation2 + $0xc8] sm:$0xff]
      %v931 = vld [vmem:[#allocation2 + $0xd8] sm:$0xff]
      %v932 = vld [vmem:[#allocation2 + $0xe0] sm:$0xff]
      %v933 = vld [vmem:[#allocation2 + $0xf0] sm:$0xff]
      %v934 = vld [vmem:[#allocation2 + $0xf8] sm:$0xff]
      %v935 = vld [vmem:[#allocation2 + $0x108] sm:$0xff]
      %v936 = vld [vmem:[#allocation2 + $0x110] sm:$0xff]
      %v937 = vld [vmem:[#allocation2 + $0x120] sm:$0xff]
      %v938 = vld [vmem:[#allocation2 + $0x128] sm:$0xff]
      %v939 = vld [vmem:[#allocation2 + $0x138] sm:$0xff]
      %v940 = vld [vmem:[#allocation2 + $0x140] sm:$0xff]
      %v941 = vld [vmem:[#allocation2 + $0x150] sm:$0xff]
      %v942 = vld [vmem:[#allocation2 + $0x158] sm:$0xff]
      %v943 = vld [vmem:[#allocation2 + $0x168] sm:$0xff]
      %v944 = vld [vmem:[#allocation2 + $0x170] sm:$0xff]
      %v945 = vld [vmem:[#allocation2 + $0x1] sm:$0xff]
      %v946 = vld [vmem:[#allocation2 + $0x9] sm:$0xff]
      %v947 = vld [vmem:[#allocation2 + $0x19] sm:$0xff]
      %v948 = vld [vmem:[#allocation2 + $0x21] sm:$0xff]
      %v949 = vld [vmem:[#allocation2 + $0x31] sm:$0xff]
      %v950 = vld [vmem:[#allocation2 + $0x39] sm:$0xff]
      %v951 = vld [vmem:[#allocation2 + $0x49] sm:$0xff]
      %v952 = vld [vmem:[#allocation2 + $0x51] sm:$0xff]
      %v953 = vld [vmem:[#allocation2 + $0x61] sm:$0xff]
      %v954 = vld [vmem:[#allocation2 + $0x69] sm:$0xff]
      %v955 = vld [vmem:[#allocation2 + $0x79] sm:$0xff]
      %v956 = vld [vmem:[#allocation2 + $0x81] sm:$0xff]
      %v957 = vld [vmem:[#allocation2 + $0x91] sm:$0xff]
      %v958 = vld [vmem:[#allocation2 + $0x99] sm:$0xff]
      %v959 = vld [vmem:[#allocation2 + $0xa9] sm:$0xff]
      %v960 = vld [vmem:[#allocation2 + $0xb1] sm:$0xff]
      %v961 = vld [vmem:[#allocation2 + $0xc1] sm:$0xff]
      %v962 = vld [vmem:[#allocation2 + $0xc9] sm:$0xff]
      %v963 = vld [vmem:[#allocation2 + $0xd9] sm:$0xff]
      %v964 = vld [vmem:[#allocation2 + $0xe1] sm:$0xff]
      %v965 = vld [vmem:[#allocation2 + $0xf1] sm:$0xff]
      %v966 = vld [vmem:[#allocation2 + $0xf9] sm:$0xff]
      %v967 = vld [vmem:[#allocation2 + $0x109] sm:$0xff]
      %v968 = vld [vmem:[#allocation2 + $0x111] sm:$0xff]
      %v969 = vld [vmem:[#allocation2 + $0x121] sm:$0xff]
      %v970 = vld [vmem:[#allocation2 + $0x129] sm:$0xff]
      %v971 = vld [vmem:[#allocation2 + $0x139] sm:$0xff]
      %v972 = vld [vmem:[#allocation2 + $0x141] sm:$0xff]
      %v973 = vld [vmem:[#allocation2 + $0x151] sm:$0xff]
      %v974 = vld [vmem:[#allocation2 + $0x159] sm:$0xff]
      %v975 = vld [vmem:[#allocation2 + $0x169] sm:$0xff]
      %v976 = vld [vmem:[#allocation2 + $0x171] sm:$0xff]
      %v977 = vld [vmem:[#allocation2 + $0x2] sm:$0xff]
      %v978 = vld [vmem:[#allocation2 + $0xa] sm:$0xff]
      %v979 = vld [vmem:[#allocation2 + $0x1a] sm:$0xff]
      %v980 = vld [vmem:[#allocation2 + $0x22] sm:$0xff]
      %v981 = vld [vmem:[#allocation2 + $0x32] sm:$0xff]
      %v982 = vld [vmem:[#allocation2 + $0x3a] sm:$0xff]
      %v983 = vld [vmem:[#allocation2 + $0x4a] sm:$0xff]
      %v984 = vld [vmem:[#allocation2 + $0x52] sm:$0xff]
      %v985 = vld [vmem:[#allocation2 + $0x62] sm:$0xff]
      %v986 = vld [vmem:[#allocation2 + $0x6a] sm:$0xff]
      %v987 = vld [vmem:[#allocation2 + $0x7a] sm:$0xff]
      %v988 = vld [vmem:[#allocation2 + $0x82] sm:$0xff]
      %v989 = vld [vmem:[#allocation2 + $0x92] sm:$0xff]
      %v990 = vld [vmem:[#allocation2 + $0x9a] sm:$0xff]
      %v991 = vld [vmem:[#allocation2 + $0xaa] sm:$0xff]
      %v992 = vld [vmem:[#allocation2 + $0xb2] sm:$0xff]
      %v993 = vld [vmem:[#allocation2 + $0xc2] sm:$0xff]
      %v994 = vld [vmem:[#allocation2 + $0xca] sm:$0xff]
      %v995 = vld [vmem:[#allocation2 + $0xda] sm:$0xff]
      %v996 = vld [vmem:[#allocation2 + $0xe2] sm:$0xff]
      %v997 = vld [vmem:[#allocation2 + $0xf2] sm:$0xff]
      %v998 = vld [vmem:[#allocation2 + $0xfa] sm:$0xff]
      %v999 = vld [vmem:[#allocation2 + $0x10a] sm:$0xff]
      %v1000 = vld [vmem:[#allocation2 + $0x112] sm:$0xff]
      %v1001 = vld [vmem:[#allocation2 + $0x122] sm:$0xff]
      %v1002 = vld [vmem:[#allocation2 + $0x12a] sm:$0xff]
      %v1003 = vld [vmem:[#allocation2 + $0x13a] sm:$0xff]
      %v1004 = vld [vmem:[#allocation2 + $0x142] sm:$0xff]
      %v1005 = vld [vmem:[#allocation2 + $0x152] sm:$0xff]
      %v1006 = vld [vmem:[#allocation2 + $0x15a] sm:$0xff]
      %v1007 = vld [vmem:[#allocation2 + $0x16a] sm:$0xff]
      %v1008 = vld [vmem:[#allocation2 + $0x172] sm:$0xff]
      %v1009 = vld [vmem:[%s880] sm:$0xff]
      %v1010 = vld [vmem:[%s880 + $0x8] sm:$0xff]
      %v1011 = vld [vmem:[%s880 + $0x18] sm:$0xff]
      %v1012 = vld [vmem:[%s880 + $0x20] sm:$0xff]
      %v1013 = vld [vmem:[%s880 + $0x30] sm:$0xff]
      %v1014 = vld [vmem:[%s880 + $0x38] sm:$0xff]
      %v1015 = vld [vmem:[%s880 + $0x48] sm:$0xff]
      %v1016 = vld [vmem:[%s880 + $0x50] sm:$0xff]
      %v1017 = vld [vmem:[%s880 + $0x60] sm:$0xff]
      %v1018 = vld [vmem:[%s880 + $0x68] sm:$0xff]
      %v1019 = vld [vmem:[%s880 + $0x78] sm:$0xff]
      %v1020 = vld [vmem:[%s880 + $0x80] sm:$0xff]
      %v1021 = vld [vmem:[%s880 + $0x90] sm:$0xff]
      %v1022 = vld [vmem:[%s880 + $0x98] sm:$0xff]
      %v1023 = vld [vmem:[%s880 + $0xa8] sm:$0xff]
      %v1024 = vld [vmem:[%s880 + $0xb0] sm:$0xff]
      %v1025 = vld [vmem:[%s880 + $0xc0] sm:$0xff]
      %v1026 = vld [vmem:[%s880 + $0xc8] sm:$0xff]
      %v1027 = vld [vmem:[%s880 + $0xd8] sm:$0xff]
      %v1028 = vld [vmem:[%s880 + $0xe0] sm:$0xff]
      %v1029 = vld [vmem:[%s880 + $0xf0] sm:$0xff]
      %v1030 = vld [vmem:[%s880 + $0xf8] sm:$0xff]
      %v1031 = vld [vmem:[%s880 + $0x108] sm:$0xff]
      %v1032 = vld [vmem:[%s880 + $0x110] sm:$0xff]
      %v1033 = vld [vmem:[%s880 + $0x120] sm:$0xff]
      %v1034 = vld [vmem:[%s880 + $0x128] sm:$0xff]
      %v1035 = vld [vmem:[%s880 + $0x138] sm:$0xff]
      %v1036 = vld [vmem:[%s880 + $0x140] sm:$0xff]
      %v1037 = vld [vmem:[%s880 + $0x150] sm:$0xff]
      %v1038 = vld [vmem:[%s880 + $0x158] sm:$0xff]
      %v1039 = vld [vmem:[%s880 + $0x168] sm:$0xff]
      %v1040 = vld [vmem:[%s880 + $0x170] sm:$0xff]
      %v1041 = vld [vmem:[%s880 + $0x1] sm:$0xff]
      %v1042 = vld [vmem:[%s880 + $0x9] sm:$0xff]
      %v1043 = vld [vmem:[%s880 + $0x19] sm:$0xff]
      %v1044 = vld [vmem:[%s880 + $0x21] sm:$0xff]
      %v1045 = vld [vmem:[%s880 + $0x31] sm:$0xff]
      %v1046 = vld [vmem:[%s880 + $0x39] sm:$0xff]
      %v1047 = vld [vmem:[%s880 + $0x49] sm:$0xff]
      %v1048 = vld [vmem:[%s880 + $0x51] sm:$0xff]
      %v1049 = vld [vmem:[%s880 + $0x61] sm:$0xff]
      %v1050 = vld [vmem:[%s880 + $0x69] sm:$0xff]
      %v1051 = vld [vmem:[%s880 + $0x79] sm:$0xff]
      %v1052 = vld [vmem:[%s880 + $0x81] sm:$0xff]
      %v1053 = vld [vmem:[%s880 + $0x91] sm:$0xff]
      %v1054 = vld [vmem:[%s880 + $0x99] sm:$0xff]
      %v1055 = vld [vmem:[%s880 + $0xa9] sm:$0xff]
      %v1056 = vld [vmem:[%s880 + $0xb1] sm:$0xff]
      %v1057 = vld [vmem:[%s880 + $0xc1] sm:$0xff]
      %v1058 = vld [vmem:[%s880 + $0xc9] sm:$0xff]
      %v1059 = vld [vmem:[%s880 + $0xd9] sm:$0xff]
      %v1060 = vld [vmem:[%s880 + $0xe1] sm:$0xff]
      %v1061 = vld [vmem:[%s880 + $0xf1] sm:$0xff]
      %v1062 = vld [vmem:[%s880 + $0xf9] sm:$0xff]
      %v1063 = vld [vmem:[%s880 + $0x109] sm:$0xff]
      %v1064 = vld [vmem:[%s880 + $0x111] sm:$0xff]
      %v1065 = vld [vmem:[%s880 + $0x121] sm:$0xff]
      %v1066 = vld [vmem:[%s880 + $0x129] sm:$0xff]
      %v1067 = vld [vmem:[%s880 + $0x139] sm:$0xff]
      %v1068 = vld [vmem:[%s880 + $0x141] sm:$0xff]
      %v1069 = vld [vmem:[%s880 + $0x151] sm:$0xff]
      %v1070 = vld [vmem:[%s880 + $0x159] sm:$0xff]
      %v1071 = vld [vmem:[%s880 + $0x169] sm:$0xff]
      %v1072 = vld [vmem:[%s880 + $0x171] sm:$0xff]
      %v1073 = vld [vmem:[%s880 + $0x2] sm:$0xff]
      %v1074 = vld [vmem:[%s880 + $0xa] sm:$0xff]
      %v1075 = vld [vmem:[%s880 + $0x1a] sm:$0xff]
      %v1076 = vld [vmem:[%s880 + $0x22] sm:$0xff]
      %v1077 = vld [vmem:[%s880 + $0x32] sm:$0xff]
      %v1078 = vld [vmem:[%s880 + $0x3a] sm:$0xff]
      %v1079 = vld [vmem:[%s880 + $0x4a] sm:$0xff]
      %v1080 = vld [vmem:[%s880 + $0x52] sm:$0xff]
      %v1081 = vld [vmem:[%s880 + $0x62] sm:$0xff]
      %v1082 = vld [vmem:[%s880 + $0x6a] sm:$0xff]
      %v1083 = vld [vmem:[%s880 + $0x7a] sm:$0xff]
      %v1084 = vld [vmem:[%s880 + $0x82] sm:$0xff]
      %v1085 = vld [vmem:[%s880 + $0x92] sm:$0xff]
      %v1086 = vld [vmem:[%s880 + $0x9a] sm:$0xff]
      %v1087 = vld [vmem:[%s880 + $0xaa] sm:$0xff]
      %v1088 = vld [vmem:[%s880 + $0xb2] sm:$0xff]
      %v1089 = vld [vmem:[%s880 + $0xc2] sm:$0xff]
      %v1090 = vld [vmem:[%s880 + $0xca] sm:$0xff]
      %v1091 = vld [vmem:[%s880 + $0xda] sm:$0xff]
      %v1092 = vld [vmem:[%s880 + $0xe2] sm:$0xff]
      %v1093 = vld [vmem:[%s880 + $0xf2] sm:$0xff]
      %v1094 = vld [vmem:[%s880 + $0xfa] sm:$0xff]
      %v1095 = vld [vmem:[%s880 + $0x10a] sm:$0xff]
      %v1096 = vld [vmem:[%s880 + $0x112] sm:$0xff]
      %v1097 = vld [vmem:[%s880 + $0x122] sm:$0xff]
      %v1098 = vld [vmem:[%s880 + $0x12a] sm:$0xff]
      %v1099 = vld [vmem:[%s880 + $0x13a] sm:$0xff]
      %v1100 = vld [vmem:[%s880 + $0x142] sm:$0xff]
      %v1101 = vld [vmem:[%s880 + $0x152] sm:$0xff]
      %v1102 = vld [vmem:[%s880 + $0x15a] sm:$0xff]
      %v1103 = vld [vmem:[%s880 + $0x16a] sm:$0xff]
      %v1104 = vld [vmem:[%s880 + $0x172] sm:$0xff]
      %s1105 = scalar_lea.vmem [#allocation2], 48
      %v1106 = vld [vmem:[%s1105] sm:$0xff]
      %v1107 = vld [vmem:[%s1105 + $0x8] sm:$0xff]
      %v1108 = vld [vmem:[%s1105 + $0x18] sm:$0xff]
      %v1109 = vld [vmem:[%s1105 + $0x20] sm:$0xff]
      %v1110 = vld [vmem:[%s1105 + $0x30] sm:$0xff]
      %v1111 = vld [vmem:[%s1105 + $0x38] sm:$0xff]
      %v1112 = vld [vmem:[%s1105 + $0x48] sm:$0xff]
      %v1113 = vld [vmem:[%s1105 + $0x50] sm:$0xff]
      %v1114 = vld [vmem:[%s1105 + $0x60] sm:$0xff]
      %v1115 = vld [vmem:[%s1105 + $0x68] sm:$0xff]
      %v1116 = vld [vmem:[%s1105 + $0x78] sm:$0xff]
      %v1117 = vld [vmem:[%s1105 + $0x80] sm:$0xff]
      %v1118 = vld [vmem:[%s1105 + $0x90] sm:$0xff]
      %v1119 = vld [vmem:[%s1105 + $0x98] sm:$0xff]
      %v1120 = vld [vmem:[%s1105 + $0xa8] sm:$0xff]
      %v1121 = vld [vmem:[%s1105 + $0xb0] sm:$0xff]
      %v1122 = vld [vmem:[%s1105 + $0xc0] sm:$0xff]
      %v1123 = vld [vmem:[%s1105 + $0xc8] sm:$0xff]
      %v1124 = vld [vmem:[%s1105 + $0xd8] sm:$0xff]
      %v1125 = vld [vmem:[%s1105 + $0xe0] sm:$0xff]
      %v1126 = vld [vmem:[%s1105 + $0xf0] sm:$0xff]
      %v1127 = vld [vmem:[%s1105 + $0xf8] sm:$0xff]
      %v1128 = vld [vmem:[%s1105 + $0x108] sm:$0xff]
      %v1129 = vld [vmem:[%s1105 + $0x110] sm:$0xff]
      %v1130 = vld [vmem:[%s1105 + $0x120] sm:$0xff]
      %v1131 = vld [vmem:[%s1105 + $0x128] sm:$0xff]
      %v1132 = vld [vmem:[%s1105 + $0x138] sm:$0xff]
      %v1133 = vld [vmem:[%s1105 + $0x140] sm:$0xff]
      %v1134 = vld [vmem:[%s1105 + $0x150] sm:$0xff]
      %v1135 = vld [vmem:[%s1105 + $0x158] sm:$0xff]
      %v1136 = vld [vmem:[%s1105 + $0x168] sm:$0xff]
      %v1137 = vld [vmem:[%s1105 + $0x170] sm:$0xff]
      %v1138 = vld [vmem:[%s1105 + $0x1] sm:$0xff]
      %v1139 = vld [vmem:[%s1105 + $0x9] sm:$0xff]
      %v1140 = vld [vmem:[%s1105 + $0x19] sm:$0xff]
      %v1141 = vld [vmem:[%s1105 + $0x21] sm:$0xff]
      %v1142 = vld [vmem:[%s1105 + $0x31] sm:$0xff]
      %v1143 = vld [vmem:[%s1105 + $0x39] sm:$0xff]
      %v1144 = vld [vmem:[%s1105 + $0x49] sm:$0xff]
      %v1145 = vld [vmem:[%s1105 + $0x51] sm:$0xff]
      %v1146 = vld [vmem:[%s1105 + $0x61] sm:$0xff]
      %v1147 = vld [vmem:[%s1105 + $0x69] sm:$0xff]
      %v1148 = vld [vmem:[%s1105 + $0x79] sm:$0xff]
      %v1149 = vld [vmem:[%s1105 + $0x81] sm:$0xff]
      %v1150 = vld [vmem:[%s1105 + $0x91] sm:$0xff]
      %v1151 = vld [vmem:[%s1105 + $0x99] sm:$0xff]
      %v1152 = vld [vmem:[%s1105 + $0xa9] sm:$0xff]
      %v1153 = vld [vmem:[%s1105 + $0xb1] sm:$0xff]
      %v1154 = vld [vmem:[%s1105 + $0xc1] sm:$0xff]
      %v1155 = vld [vmem:[%s1105 + $0xc9] sm:$0xff]
      %v1156 = vld [vmem:[%s1105 + $0xd9] sm:$0xff]
      %v1157 = vld [vmem:[%s1105 + $0xe1] sm:$0xff]
      %v1158 = vld [vmem:[%s1105 + $0xf1] sm:$0xff]
      %v1159 = vld [vmem:[%s1105 + $0xf9] sm:$0xff]
      %v1160 = vld [vmem:[%s1105 + $0x109] sm:$0xff]
      %v1161 = vld [vmem:[%s1105 + $0x111] sm:$0xff]
      %v1162 = vld [vmem:[%s1105 + $0x121] sm:$0xff]
      %v1163 = vld [vmem:[%s1105 + $0x129] sm:$0xff]
      %v1164 = vld [vmem:[%s1105 + $0x139] sm:$0xff]
      %v1165 = vld [vmem:[%s1105 + $0x141] sm:$0xff]
      %v1166 = vld [vmem:[%s1105 + $0x151] sm:$0xff]
      %v1167 = vld [vmem:[%s1105 + $0x159] sm:$0xff]
      %v1168 = vld [vmem:[%s1105 + $0x169] sm:$0xff]
      %v1169 = vld [vmem:[%s1105 + $0x171] sm:$0xff]
      %v1170 = vld [vmem:[%s1105 + $0x2] sm:$0xff]
      %v1171 = vld [vmem:[%s1105 + $0xa] sm:$0xff]
      %v1172 = vld [vmem:[%s1105 + $0x1a] sm:$0xff]
      %v1173 = vld [vmem:[%s1105 + $0x22] sm:$0xff]
      %v1174 = vld [vmem:[%s1105 + $0x32] sm:$0xff]
      %v1175 = vld [vmem:[%s1105 + $0x3a] sm:$0xff]
      %v1176 = vld [vmem:[%s1105 + $0x4a] sm:$0xff]
      %v1177 = vld [vmem:[%s1105 + $0x52] sm:$0xff]
      %v1178 = vld [vmem:[%s1105 + $0x62] sm:$0xff]
      %v1179 = vld [vmem:[%s1105 + $0x6a] sm:$0xff]
      %v1180 = vld [vmem:[%s1105 + $0x7a] sm:$0xff]
      %v1181 = vld [vmem:[%s1105 + $0x82] sm:$0xff]
      %v1182 = vld [vmem:[%s1105 + $0x92] sm:$0xff]
      %v1183 = vld [vmem:[%s1105 + $0x9a] sm:$0xff]
      %v1184 = vld [vmem:[%s1105 + $0xaa] sm:$0xff]
      %v1185 = vld [vmem:[%s1105 + $0xb2] sm:$0xff]
      %v1186 = vld [vmem:[%s1105 + $0xc2] sm:$0xff]
      %v1187 = vld [vmem:[%s1105 + $0xca] sm:$0xff]
      %v1188 = vld [vmem:[%s1105 + $0xda] sm:$0xff]
      %v1189 = vld [vmem:[%s1105 + $0xe2] sm:$0xff]
      %v1190 = vld [vmem:[%s1105 + $0xf2] sm:$0xff]
      %v1191 = vld [vmem:[%s1105 + $0xfa] sm:$0xff]
      %v1192 = vld [vmem:[%s1105 + $0x10a] sm:$0xff]
      %v1193 = vld [vmem:[%s1105 + $0x112] sm:$0xff]
      %v1194 = vld [vmem:[%s1105 + $0x122] sm:$0xff]
      %v1195 = vld [vmem:[%s1105 + $0x12a] sm:$0xff]
      %v1196 = vld [vmem:[%s1105 + $0x13a] sm:$0xff]
      %v1197 = vld [vmem:[%s1105 + $0x142] sm:$0xff]
      %v1198 = vld [vmem:[%s1105 + $0x152] sm:$0xff]
      %v1199 = vld [vmem:[%s1105 + $0x15a] sm:$0xff]
      %v1200 = vld [vmem:[%s1105 + $0x16a] sm:$0xff]
      %v1201 = vld [vmem:[%s1105 + $0x172] sm:$0xff]
      %1234 = vrot.lane.b32.xlu0 %v945, 4
      %v1235 = vpop.permute.xlu0 %1234
      %1236 = vrot.lane.b32.xlu0 %v946, 4
      %v1237 = vpop.permute.xlu0 %1236
      %1238 = vrot.lane.b32.xlu0 %v947, 4
      %v1239 = vpop.permute.xlu0 %1238
      %1240 = vrot.lane.b32.xlu0 %v948, 4
      %v1241 = vpop.permute.xlu0 %1240
      %1242 = vrot.lane.b32.xlu0 %v949, 4
      %v1243 = vpop.permute.xlu0 %1242
      %1244 = vrot.lane.b32.xlu0 %v950, 4
      %v1245 = vpop.permute.xlu0 %1244
      %1246 = vrot.lane.b32.xlu0 %v951, 4
      %v1247 = vpop.permute.xlu0 %1246
      %1248 = vrot.lane.b32.xlu0 %v952, 4
      %v1249 = vpop.permute.xlu0 %1248
      %1250 = vrot.lane.b32.xlu0 %v953, 4
      %v1251 = vpop.permute.xlu0 %1250
      %1252 = vrot.lane.b32.xlu0 %v954, 4
      %v1253 = vpop.permute.xlu0 %1252
      %1254 = vrot.lane.b32.xlu0 %v955, 4
      %v1255 = vpop.permute.xlu0 %1254
      %1256 = vrot.lane.b32.xlu0 %v956, 4
      %v1257 = vpop.permute.xlu0 %1256
      %1258 = vrot.lane.b32.xlu0 %v957, 4
      %v1259 = vpop.permute.xlu0 %1258
      %1260 = vrot.lane.b32.xlu0 %v958, 4
      %v1261 = vpop.permute.xlu0 %1260
      %1262 = vrot.lane.b32.xlu0 %v959, 4
      %v1263 = vpop.permute.xlu0 %1262
      %1264 = vrot.lane.b32.xlu0 %v960, 4
      %v1265 = vpop.permute.xlu0 %1264
      %1266 = vrot.lane.b32.xlu0 %v961, 4
      %v1267 = vpop.permute.xlu0 %1266
      %1268 = vrot.lane.b32.xlu0 %v962, 4
      %v1269 = vpop.permute.xlu0 %1268
      %1270 = vrot.lane.b32.xlu0 %v963, 4
      %v1271 = vpop.permute.xlu0 %1270
      %1272 = vrot.lane.b32.xlu0 %v964, 4
      %v1273 = vpop.permute.xlu0 %1272
      %1274 = vrot.lane.b32.xlu0 %v965, 4
      %v1275 = vpop.permute.xlu0 %1274
      %1276 = vrot.lane.b32.xlu0 %v966, 4
      %v1277 = vpop.permute.xlu0 %1276
      %1278 = vrot.lane.b32.xlu0 %v967, 4
      %v1279 = vpop.permute.xlu0 %1278
      %1280 = vrot.lane.b32.xlu0 %v968, 4
      %v1281 = vpop.permute.xlu0 %1280
      %1282 = vrot.lane.b32.xlu0 %v969, 4
      %v1283 = vpop.permute.xlu0 %1282
      %1284 = vrot.lane.b32.xlu0 %v970, 4
      %v1285 = vpop.permute.xlu0 %1284
      %1286 = vrot.lane.b32.xlu0 %v971, 4
      %v1287 = vpop.permute.xlu0 %1286
      %1288 = vrot.lane.b32.xlu0 %v972, 4
      %v1289 = vpop.permute.xlu0 %1288
      %1290 = vrot.lane.b32.xlu0 %v973, 4
      %v1291 = vpop.permute.xlu0 %1290
      %1292 = vrot.lane.b32.xlu0 %v974, 4
      %v1293 = vpop.permute.xlu0 %1292
      %1294 = vrot.lane.b32.xlu0 %v975, 4
      %v1295 = vpop.permute.xlu0 %1294
      %1296 = vrot.lane.b32.xlu0 %v976, 4
      %v1297 = vpop.permute.xlu0 %1296
      %1362 = vrot.lane.b32.xlu0 %v977, 8
      %v1363 = vpop.permute.xlu0 %1362
      %1364 = vrot.lane.b32.xlu0 %v978, 8
      %v1365 = vpop.permute.xlu0 %1364
      %1366 = vrot.lane.b32.xlu0 %v979, 8
      %v1367 = vpop.permute.xlu0 %1366
      %1368 = vrot.lane.b32.xlu0 %v980, 8
      %v1369 = vpop.permute.xlu0 %1368
      %1370 = vrot.lane.b32.xlu0 %v981, 8
      %v1371 = vpop.permute.xlu0 %1370
      %1372 = vrot.lane.b32.xlu0 %v982, 8
      %v1373 = vpop.permute.xlu0 %1372
      %1374 = vrot.lane.b32.xlu0 %v983, 8
      %v1375 = vpop.permute.xlu0 %1374
      %1376 = vrot.lane.b32.xlu0 %v984, 8
      %v1377 = vpop.permute.xlu0 %1376
      %1378 = vrot.lane.b32.xlu0 %v985, 8
      %v1379 = vpop.permute.xlu0 %1378
      %1380 = vrot.lane.b32.xlu0 %v986, 8
      %v1381 = vpop.permute.xlu0 %1380
      %1382 = vrot.lane.b32.xlu0 %v987, 8
      %v1383 = vpop.permute.xlu0 %1382
      %1384 = vrot.lane.b32.xlu0 %v988, 8
      %v1385 = vpop.permute.xlu0 %1384
      %1386 = vrot.lane.b32.xlu0 %v989, 8
      %v1387 = vpop.permute.xlu0 %1386
      %1388 = vrot.lane.b32.xlu0 %v990, 8
      %v1389 = vpop.permute.xlu0 %1388
      %1390 = vrot.lane.b32.xlu0 %v991, 8
      %v1391 = vpop.permute.xlu0 %1390
      %1392 = vrot.lane.b32.xlu0 %v992, 8
      %v1393 = vpop.permute.xlu0 %1392
      %1394 = vrot.lane.b32.xlu0 %v993, 8
      %v1395 = vpop.permute.xlu0 %1394
      %1396 = vrot.lane.b32.xlu0 %v994, 8
      %v1397 = vpop.permute.xlu0 %1396
      %1398 = vrot.lane.b32.xlu0 %v995, 8
      %v1399 = vpop.permute.xlu0 %1398
      %1400 = vrot.lane.b32.xlu0 %v996, 8
      %v1401 = vpop.permute.xlu0 %1400
      %1402 = vrot.lane.b32.xlu0 %v997, 8
      %v1403 = vpop.permute.xlu0 %1402
      %1404 = vrot.lane.b32.xlu0 %v998, 8
      %v1405 = vpop.permute.xlu0 %1404
      %1406 = vrot.lane.b32.xlu0 %v999, 8
      %v1407 = vpop.permute.xlu0 %1406
      %1408 = vrot.lane.b32.xlu0 %v1000, 8
      %v1409 = vpop.permute.xlu0 %1408
      %1410 = vrot.lane.b32.xlu0 %v1001, 8
      %v1411 = vpop.permute.xlu0 %1410
      %1412 = vrot.lane.b32.xlu0 %v1002, 8
      %v1413 = vpop.permute.xlu0 %1412
      %1414 = vrot.lane.b32.xlu0 %v1003, 8
      %v1415 = vpop.permute.xlu0 %1414
      %1416 = vrot.lane.b32.xlu0 %v1004, 8
      %v1417 = vpop.permute.xlu0 %1416
      %1418 = vrot.lane.b32.xlu0 %v1005, 8
      %v1419 = vpop.permute.xlu0 %1418
      %1420 = vrot.lane.b32.xlu0 %v1006, 8
      %v1421 = vpop.permute.xlu0 %1420
      %1422 = vrot.lane.b32.xlu0 %v1007, 8
      %v1423 = vpop.permute.xlu0 %1422
      %1424 = vrot.lane.b32.xlu0 %v1008, 8
      %v1425 = vpop.permute.xlu0 %1424
      %1490 = vrot.lane.b32.xlu0 %v1009, 12
      %v1491 = vpop.permute.xlu0 %1490
      %1492 = vrot.lane.b32.xlu0 %v1010, 12
      %v1493 = vpop.permute.xlu0 %1492
      %1494 = vrot.lane.b32.xlu0 %v1011, 12
      %v1495 = vpop.permute.xlu0 %1494
      %1496 = vrot.lane.b32.xlu0 %v1012, 12
      %v1497 = vpop.permute.xlu0 %1496
      %1498 = vrot.lane.b32.xlu0 %v1013, 12
      %v1499 = vpop.permute.xlu0 %1498
      %1500 = vrot.lane.b32.xlu0 %v1014, 12
      %v1501 = vpop.permute.xlu0 %1500
      %1502 = vrot.lane.b32.xlu0 %v1015, 12
      %v1503 = vpop.permute.xlu0 %1502
      %1504 = vrot.lane.b32.xlu0 %v1016, 12
      %v1505 = vpop.permute.xlu0 %1504
      %1506 = vrot.lane.b32.xlu0 %v1017, 12
      %v1507 = vpop.permute.xlu0 %1506
      %1508 = vrot.lane.b32.xlu0 %v1018, 12
      %v1509 = vpop.permute.xlu0 %1508
      %1510 = vrot.lane.b32.xlu0 %v1019, 12
      %v1511 = vpop.permute.xlu0 %1510
      %1512 = vrot.lane.b32.xlu0 %v1020, 12
      %v1513 = vpop.permute.xlu0 %1512
      %1514 = vrot.lane.b32.xlu0 %v1021, 12
      %v1515 = vpop.permute.xlu0 %1514
      %1516 = vrot.lane.b32.xlu0 %v1022, 12
      %v1517 = vpop.permute.xlu0 %1516
      %1518 = vrot.lane.b32.xlu0 %v1023, 12
      %v1519 = vpop.permute.xlu0 %1518
      %1520 = vrot.lane.b32.xlu0 %v1024, 12
      %v1521 = vpop.permute.xlu0 %1520
      %1522 = vrot.lane.b32.xlu0 %v1025, 12
      %v1523 = vpop.permute.xlu0 %1522
      %1524 = vrot.lane.b32.xlu0 %v1026, 12
      %v1525 = vpop.permute.xlu0 %1524
      %1526 = vrot.lane.b32.xlu0 %v1027, 12
      %v1527 = vpop.permute.xlu0 %1526
      %1528 = vrot.lane.b32.xlu0 %v1028, 12
      %v1529 = vpop.permute.xlu0 %1528
      %1530 = vrot.lane.b32.xlu0 %v1029, 12
      %v1531 = vpop.permute.xlu0 %1530
      %1532 = vrot.lane.b32.xlu0 %v1030, 12
      %v1533 = vpop.permute.xlu0 %1532
      %1534 = vrot.lane.b32.xlu0 %v1031, 12
      %v1535 = vpop.permute.xlu0 %1534
      %1536 = vrot.lane.b32.xlu0 %v1032, 12
      %v1537 = vpop.permute.xlu0 %1536
      %1538 = vrot.lane.b32.xlu0 %v1033, 12
      %v1539 = vpop.permute.xlu0 %1538
      %1540 = vrot.lane.b32.xlu0 %v1034, 12
      %v1541 = vpop.permute.xlu0 %1540
      %1542 = vrot.lane.b32.xlu0 %v1035, 12
      %v1543 = vpop.permute.xlu0 %1542
      %1544 = vrot.lane.b32.xlu0 %v1036, 12
      %v1545 = vpop.permute.xlu0 %1544
      %1546 = vrot.lane.b32.xlu0 %v1037, 12
      %v1547 = vpop.permute.xlu0 %1546
      %1548 = vrot.lane.b32.xlu0 %v1038, 12
      %v1549 = vpop.permute.xlu0 %1548
      %1550 = vrot.lane.b32.xlu0 %v1039, 12
      %v1551 = vpop.permute.xlu0 %1550
      %1552 = vrot.lane.b32.xlu0 %v1040, 12
      %v1553 = vpop.permute.xlu0 %1552
      %1618 = vrot.lane.b32.xlu0 %v1041, 16
      %v1619 = vpop.permute.xlu0 %1618
      %1620 = vrot.lane.b32.xlu0 %v1042, 16
      %v1621 = vpop.permute.xlu0 %1620
      %1622 = vrot.lane.b32.xlu0 %v1043, 16
      %v1623 = vpop.permute.xlu0 %1622
      %1624 = vrot.lane.b32.xlu0 %v1044, 16
      %v1625 = vpop.permute.xlu0 %1624
      %1626 = vrot.lane.b32.xlu0 %v1045, 16
      %v1627 = vpop.permute.xlu0 %1626
      %1628 = vrot.lane.b32.xlu0 %v1046, 16
      %v1629 = vpop.permute.xlu0 %1628
      %1630 = vrot.lane.b32.xlu0 %v1047, 16
      %v1631 = vpop.permute.xlu0 %1630
      %1632 = vrot.lane.b32.xlu0 %v1048, 16
      %v1633 = vpop.permute.xlu0 %1632
      %1634 = vrot.lane.b32.xlu0 %v1049, 16
      %v1635 = vpop.permute.xlu0 %1634
      %1636 = vrot.lane.b32.xlu0 %v1050, 16
      %v1637 = vpop.permute.xlu0 %1636
      %1638 = vrot.lane.b32.xlu0 %v1051, 16
      %v1639 = vpop.permute.xlu0 %1638
      %1640 = vrot.lane.b32.xlu0 %v1052, 16
      %v1641 = vpop.permute.xlu0 %1640
      %1642 = vrot.lane.b32.xlu0 %v1053, 16
      %v1643 = vpop.permute.xlu0 %1642
      %1644 = vrot.lane.b32.xlu0 %v1054, 16
      %v1645 = vpop.permute.xlu0 %1644
      %1646 = vrot.lane.b32.xlu0 %v1055, 16
      %v1647 = vpop.permute.xlu0 %1646
      %1648 = vrot.lane.b32.xlu0 %v1056, 16
      %v1649 = vpop.permute.xlu0 %1648
      %1650 = vrot.lane.b32.xlu0 %v1057, 16
      %v1651 = vpop.permute.xlu0 %1650
      %1652 = vrot.lane.b32.xlu0 %v1058, 16
      %v1653 = vpop.permute.xlu0 %1652
      %1654 = vrot.lane.b32.xlu0 %v1059, 16
      %v1655 = vpop.permute.xlu0 %1654
      %1656 = vrot.lane.b32.xlu0 %v1060, 16
      %v1657 = vpop.permute.xlu0 %1656
      %1658 = vrot.lane.b32.xlu0 %v1061, 16
      %v1659 = vpop.permute.xlu0 %1658
      %1660 = vrot.lane.b32.xlu0 %v1062, 16
      %v1661 = vpop.permute.xlu0 %1660
      %1662 = vrot.lane.b32.xlu0 %v1063, 16
      %v1663 = vpop.permute.xlu0 %1662
      %1664 = vrot.lane.b32.xlu0 %v1064, 16
      %v1665 = vpop.permute.xlu0 %1664
      %1666 = vrot.lane.b32.xlu0 %v1065, 16
      %v1667 = vpop.permute.xlu0 %1666
      %1668 = vrot.lane.b32.xlu0 %v1066, 16
      %v1669 = vpop.permute.xlu0 %1668
      %1670 = vrot.lane.b32.xlu0 %v1067, 16
      %v1671 = vpop.permute.xlu0 %1670
      %1672 = vrot.lane.b32.xlu0 %v1068, 16
      %v1673 = vpop.permute.xlu0 %1672
      %1674 = vrot.lane.b32.xlu0 %v1069, 16
      %v1675 = vpop.permute.xlu0 %1674
      %1676 = vrot.lane.b32.xlu0 %v1070, 16
      %v1677 = vpop.permute.xlu0 %1676
      %1678 = vrot.lane.b32.xlu0 %v1071, 16
      %v1679 = vpop.permute.xlu0 %1678
      %1680 = vrot.lane.b32.xlu0 %v1072, 16
      %v1681 = vpop.permute.xlu0 %1680
      %1746 = vrot.lane.b32.xlu0 %v1073, 20
      %v1747 = vpop.permute.xlu0 %1746
      %1748 = vrot.lane.b32.xlu0 %v1074, 20
      %v1749 = vpop.permute.xlu0 %1748
      %1750 = vrot.lane.b32.xlu0 %v1075, 20
      %v1751 = vpop.permute.xlu0 %1750
      %1752 = vrot.lane.b32.xlu0 %v1076, 20
      %v1753 = vpop.permute.xlu0 %1752
      %1754 = vrot.lane.b32.xlu0 %v1077, 20
      %v1755 = vpop.permute.xlu0 %1754
      %1756 = vrot.lane.b32.xlu0 %v1078, 20
      %v1757 = vpop.permute.xlu0 %1756
      %1758 = vrot.lane.b32.xlu0 %v1079, 20
      %v1759 = vpop.permute.xlu0 %1758
      %1760 = vrot.lane.b32.xlu0 %v1080, 20
      %v1761 = vpop.permute.xlu0 %1760
      %1762 = vrot.lane.b32.xlu0 %v1081, 20
      %v1763 = vpop.permute.xlu0 %1762
      %1764 = vrot.lane.b32.xlu0 %v1082, 20
      %v1765 = vpop.permute.xlu0 %1764
      %1766 = vrot.lane.b32.xlu0 %v1083, 20
      %v1767 = vpop.permute.xlu0 %1766
      %1768 = vrot.lane.b32.xlu0 %v1084, 20
      %v1769 = vpop.permute.xlu0 %1768
      %1770 = vrot.lane.b32.xlu0 %v1085, 20
      %v1771 = vpop.permute.xlu0 %1770
      %1772 = vrot.lane.b32.xlu0 %v1086, 20
      %v1773 = vpop.permute.xlu0 %1772
      %1774 = vrot.lane.b32.xlu0 %v1087, 20
      %v1775 = vpop.permute.xlu0 %1774
      %1776 = vrot.lane.b32.xlu0 %v1088, 20
      %v1777 = vpop.permute.xlu0 %1776
      %1778 = vrot.lane.b32.xlu0 %v1089, 20
      %v1779 = vpop.permute.xlu0 %1778
      %1780 = vrot.lane.b32.xlu0 %v1090, 20
      %v1781 = vpop.permute.xlu0 %1780
      %1782 = vrot.lane.b32.xlu0 %v1091, 20
      %v1783 = vpop.permute.xlu0 %1782
      %1784 = vrot.lane.b32.xlu0 %v1092, 20
      %v1785 = vpop.permute.xlu0 %1784
      %1786 = vrot.lane.b32.xlu0 %v1093, 20
      %v1787 = vpop.permute.xlu0 %1786
      %1788 = vrot.lane.b32.xlu0 %v1094, 20
      %v1789 = vpop.permute.xlu0 %1788
      %1790 = vrot.lane.b32.xlu0 %v1095, 20
      %v1791 = vpop.permute.xlu0 %1790
      %1792 = vrot.lane.b32.xlu0 %v1096, 20
      %v1793 = vpop.permute.xlu0 %1792
      %1794 = vrot.lane.b32.xlu0 %v1097, 20
      %v1795 = vpop.permute.xlu0 %1794
      %1796 = vrot.lane.b32.xlu0 %v1098, 20
      %v1797 = vpop.permute.xlu0 %1796
      %1798 = vrot.lane.b32.xlu0 %v1099, 20
      %v1799 = vpop.permute.xlu0 %1798
      %1800 = vrot.lane.b32.xlu0 %v1100, 20
      %v1801 = vpop.permute.xlu0 %1800
      %1802 = vrot.lane.b32.xlu0 %v1101, 20
      %v1803 = vpop.permute.xlu0 %1802
      %1804 = vrot.lane.b32.xlu0 %v1102, 20
      %v1805 = vpop.permute.xlu0 %1804
      %1806 = vrot.lane.b32.xlu0 %v1103, 20
      %v1807 = vpop.permute.xlu0 %1806
      %1808 = vrot.lane.b32.xlu0 %v1104, 20
      %v1809 = vpop.permute.xlu0 %1808
      %1874 = vrot.lane.b32.xlu0 %v1106, 24
      %v1875 = vpop.permute.xlu0 %1874
      %1876 = vrot.lane.b32.xlu0 %v1107, 24
      %v1877 = vpop.permute.xlu0 %1876
      %1878 = vrot.lane.b32.xlu0 %v1108, 24
      %v1879 = vpop.permute.xlu0 %1878
      %1880 = vrot.lane.b32.xlu0 %v1109, 24
      %v1881 = vpop.permute.xlu0 %1880
      %1882 = vrot.lane.b32.xlu0 %v1110, 24
      %v1883 = vpop.permute.xlu0 %1882
      %1884 = vrot.lane.b32.xlu0 %v1111, 24
      %v1885 = vpop.permute.xlu0 %1884
      %1886 = vrot.lane.b32.xlu0 %v1112, 24
      %v1887 = vpop.permute.xlu0 %1886
      %1888 = vrot.lane.b32.xlu0 %v1113, 24
      %v1889 = vpop.permute.xlu0 %1888
      %1890 = vrot.lane.b32.xlu0 %v1114, 24
      %v1891 = vpop.permute.xlu0 %1890
      %1892 = vrot.lane.b32.xlu0 %v1115, 24
      %v1893 = vpop.permute.xlu0 %1892
      %1894 = vrot.lane.b32.xlu0 %v1116, 24
      %v1895 = vpop.permute.xlu0 %1894
      %1896 = vrot.lane.b32.xlu0 %v1117, 24
      %v1897 = vpop.permute.xlu0 %1896
      %1898 = vrot.lane.b32.xlu0 %v1118, 24
      %v1899 = vpop.permute.xlu0 %1898
      %1900 = vrot.lane.b32.xlu0 %v1119, 24
      %v1901 = vpop.permute.xlu0 %1900
      %1902 = vrot.lane.b32.xlu0 %v1120, 24
      %v1903 = vpop.permute.xlu0 %1902
      %1904 = vrot.lane.b32.xlu0 %v1121, 24
      %v1905 = vpop.permute.xlu0 %1904
      %1906 = vrot.lane.b32.xlu0 %v1122, 24
      %v1907 = vpop.permute.xlu0 %1906
      %1908 = vrot.lane.b32.xlu0 %v1123, 24
      %v1909 = vpop.permute.xlu0 %1908
      %1910 = vrot.lane.b32.xlu0 %v1124, 24
      %v1911 = vpop.permute.xlu0 %1910
      %1912 = vrot.lane.b32.xlu0 %v1125, 24
      %v1913 = vpop.permute.xlu0 %1912
      %1914 = vrot.lane.b32.xlu0 %v1126, 24
      %v1915 = vpop.permute.xlu0 %1914
      %1916 = vrot.lane.b32.xlu0 %v1127, 24
      %v1917 = vpop.permute.xlu0 %1916
      %1918 = vrot.lane.b32.xlu0 %v1128, 24
      %v1919 = vpop.permute.xlu0 %1918
      %1920 = vrot.lane.b32.xlu0 %v1129, 24
      %v1921 = vpop.permute.xlu0 %1920
      %1922 = vrot.lane.b32.xlu0 %v1130, 24
      %v1923 = vpop.permute.xlu0 %1922
      %1924 = vrot.lane.b32.xlu0 %v1131, 24
      %v1925 = vpop.permute.xlu0 %1924
      %1926 = vrot.lane.b32.xlu0 %v1132, 24
      %v1927 = vpop.permute.xlu0 %1926
      %1928 = vrot.lane.b32.xlu0 %v1133, 24
      %v1929 = vpop.permute.xlu0 %1928
      %1930 = vrot.lane.b32.xlu0 %v1134, 24
      %v1931 = vpop.permute.xlu0 %1930
      %1932 = vrot.lane.b32.xlu0 %v1135, 24
      %v1933 = vpop.permute.xlu0 %1932
      %1934 = vrot.lane.b32.xlu0 %v1136, 24
      %v1935 = vpop.permute.xlu0 %1934
      %1936 = vrot.lane.b32.xlu0 %v1137, 24
      %v1937 = vpop.permute.xlu0 %1936
      %2002 = vrot.lane.b32.xlu0 %v1138, 28
      %v2003 = vpop.permute.xlu0 %2002
      %2004 = vrot.lane.b32.xlu0 %v1139, 28
      %v2005 = vpop.permute.xlu0 %2004
      %2006 = vrot.lane.b32.xlu0 %v1140, 28
      %v2007 = vpop.permute.xlu0 %2006
      %2008 = vrot.lane.b32.xlu0 %v1141, 28
      %v2009 = vpop.permute.xlu0 %2008
      %2010 = vrot.lane.b32.xlu0 %v1142, 28
      %v2011 = vpop.permute.xlu0 %2010
      %2012 = vrot.lane.b32.xlu0 %v1143, 28
      %v2013 = vpop.permute.xlu0 %2012
      %2014 = vrot.lane.b32.xlu0 %v1144, 28
      %v2015 = vpop.permute.xlu0 %2014
      %2016 = vrot.lane.b32.xlu0 %v1145, 28
      %v2017 = vpop.permute.xlu0 %2016
      %2018 = vrot.lane.b32.xlu0 %v1146, 28
      %v2019 = vpop.permute.xlu0 %2018
      %2020 = vrot.lane.b32.xlu0 %v1147, 28
      %v2021 = vpop.permute.xlu0 %2020
      %2022 = vrot.lane.b32.xlu0 %v1148, 28
      %v2023 = vpop.permute.xlu0 %2022
      %2024 = vrot.lane.b32.xlu0 %v1149, 28
      %v2025 = vpop.permute.xlu0 %2024
      %2026 = vrot.lane.b32.xlu0 %v1150, 28
      %v2027 = vpop.permute.xlu0 %2026
      %2028 = vrot.lane.b32.xlu0 %v1151, 28
      %v2029 = vpop.permute.xlu0 %2028
      %2030 = vrot.lane.b32.xlu0 %v1152, 28
      %v2031 = vpop.permute.xlu0 %2030
      %2032 = vrot.lane.b32.xlu0 %v1153, 28
      %v2033 = vpop.permute.xlu0 %2032
      %2034 = vrot.lane.b32.xlu0 %v1154, 28
      %v2035 = vpop.permute.xlu0 %2034
      %2036 = vrot.lane.b32.xlu0 %v1155, 28
      %v2037 = vpop.permute.xlu0 %2036
      %2038 = vrot.lane.b32.xlu0 %v1156, 28
      %v2039 = vpop.permute.xlu0 %2038
      %2040 = vrot.lane.b32.xlu0 %v1157, 28
      %v2041 = vpop.permute.xlu0 %2040
      %2042 = vrot.lane.b32.xlu0 %v1158, 28
      %v2043 = vpop.permute.xlu0 %2042
      %2044 = vrot.lane.b32.xlu0 %v1159, 28
      %v2045 = vpop.permute.xlu0 %2044
      %2046 = vrot.lane.b32.xlu0 %v1160, 28
      %v2047 = vpop.permute.xlu0 %2046
      %2048 = vrot.lane.b32.xlu0 %v1161, 28
      %v2049 = vpop.permute.xlu0 %2048
      %2050 = vrot.lane.b32.xlu0 %v1162, 28
      %v2051 = vpop.permute.xlu0 %2050
      %2052 = vrot.lane.b32.xlu0 %v1163, 28
      %v2053 = vpop.permute.xlu0 %2052
      %2054 = vrot.lane.b32.xlu0 %v1164, 28
      %v2055 = vpop.permute.xlu0 %2054
      %2056 = vrot.lane.b32.xlu0 %v1165, 28
      %v2057 = vpop.permute.xlu0 %2056
      %2058 = vrot.lane.b32.xlu0 %v1166, 28
      %v2059 = vpop.permute.xlu0 %2058
      %2060 = vrot.lane.b32.xlu0 %v1167, 28
      %v2061 = vpop.permute.xlu0 %2060
      %2062 = vrot.lane.b32.xlu0 %v1168, 28
      %v2063 = vpop.permute.xlu0 %2062
      %2064 = vrot.lane.b32.xlu0 %v1169, 28
      %v2065 = vpop.permute.xlu0 %2064
      %2130 = vrot.lane.b32.xlu0 %v1170, 32
      %v2131 = vpop.permute.xlu0 %2130
      %2132 = vrot.lane.b32.xlu0 %v1171, 32
      %v2133 = vpop.permute.xlu0 %2132
      %2134 = vrot.lane.b32.xlu0 %v1172, 32
      %v2135 = vpop.permute.xlu0 %2134
      %2136 = vrot.lane.b32.xlu0 %v1173, 32
      %v2137 = vpop.permute.xlu0 %2136
      %2138 = vrot.lane.b32.xlu0 %v1174, 32
      %v2139 = vpop.permute.xlu0 %2138
      %2140 = vrot.lane.b32.xlu0 %v1175, 32
      %v2141 = vpop.permute.xlu0 %2140
      %2142 = vrot.lane.b32.xlu0 %v1176, 32
      %v2143 = vpop.permute.xlu0 %2142
      %2144 = vrot.lane.b32.xlu0 %v1177, 32
      %v2145 = vpop.permute.xlu0 %2144
      %2146 = vrot.lane.b32.xlu0 %v1178, 32
      %v2147 = vpop.permute.xlu0 %2146
      %2148 = vrot.lane.b32.xlu0 %v1179, 32
      %v2149 = vpop.permute.xlu0 %2148
      %2150 = vrot.lane.b32.xlu0 %v1180, 32
      %v2151 = vpop.permute.xlu0 %2150
      %2152 = vrot.lane.b32.xlu0 %v1181, 32
      %v2153 = vpop.permute.xlu0 %2152
      %2154 = vrot.lane.b32.xlu0 %v1182, 32
      %v2155 = vpop.permute.xlu0 %2154
      %2156 = vrot.lane.b32.xlu0 %v1183, 32
      %v2157 = vpop.permute.xlu0 %2156
      %2158 = vrot.lane.b32.xlu0 %v1184, 32
      %v2159 = vpop.permute.xlu0 %2158
      %2160 = vrot.lane.b32.xlu0 %v1185, 32
      %v2161 = vpop.permute.xlu0 %2160
      %2162 = vrot.lane.b32.xlu0 %v1186, 32
      %v2163 = vpop.permute.xlu0 %2162
      %2164 = vrot.lane.b32.xlu0 %v1187, 32
      %v2165 = vpop.permute.xlu0 %2164
      %2166 = vrot.lane.b32.xlu0 %v1188, 32
      %v2167 = vpop.permute.xlu0 %2166
      %2168 = vrot.lane.b32.xlu0 %v1189, 32
      %v2169 = vpop.permute.xlu0 %2168
      %2170 = vrot.lane.b32.xlu0 %v1190, 32
      %v2171 = vpop.permute.xlu0 %2170
      %2172 = vrot.lane.b32.xlu0 %v1191, 32
      %v2173 = vpop.permute.xlu0 %2172
      %2174 = vrot.lane.b32.xlu0 %v1192, 32
      %v2175 = vpop.permute.xlu0 %2174
      %2176 = vrot.lane.b32.xlu0 %v1193, 32
      %v2177 = vpop.permute.xlu0 %2176
      %2178 = vrot.lane.b32.xlu0 %v1194, 32
      %v2179 = vpop.permute.xlu0 %2178
      %2180 = vrot.lane.b32.xlu0 %v1195, 32
      %v2181 = vpop.permute.xlu0 %2180
      %2182 = vrot.lane.b32.xlu0 %v1196, 32
      %v2183 = vpop.permute.xlu0 %2182
      %2184 = vrot.lane.b32.xlu0 %v1197, 32
      %v2185 = vpop.permute.xlu0 %2184
      %2186 = vrot.lane.b32.xlu0 %v1198, 32
      %v2187 = vpop.permute.xlu0 %2186
      %2188 = vrot.lane.b32.xlu0 %v1199, 32
      %v2189 = vpop.permute.xlu0 %2188
      %2190 = vrot.lane.b32.xlu0 %v1200, 32
      %v2191 = vpop.permute.xlu0 %2190
      %2192 = vrot.lane.b32.xlu0 %v1201, 32
      %v2193 = vpop.permute.xlu0 %2192
      %v2226 = vsel %vm554, %v913, %v1235
      %v2227 = vsel %vm554, %v914, %v1237
      %v2228 = vsel %vm554, %v915, %v1239
      %v2229 = vsel %vm554, %v916, %v1241
      %v2230 = vsel %vm554, %v917, %v1243
      %v2231 = vsel %vm554, %v918, %v1245
      %v2232 = vsel %vm554, %v919, %v1247
      %v2233 = vsel %vm554, %v920, %v1249
      %v2234 = vsel %vm554, %v921, %v1251
      %v2235 = vsel %vm554, %v922, %v1253
      %v2236 = vsel %vm554, %v923, %v1255
      %v2237 = vsel %vm554, %v924, %v1257
      %v2238 = vsel %vm554, %v925, %v1259
      %v2239 = vsel %vm554, %v926, %v1261
      %v2240 = vsel %vm554, %v927, %v1263
      %v2241 = vsel %vm554, %v928, %v1265
      %v2242 = vsel %vm554, %v929, %v1267
      %v2243 = vsel %vm554, %v930, %v1269
      %v2244 = vsel %vm554, %v931, %v1271
      %v2245 = vsel %vm554, %v932, %v1273
      %v2246 = vsel %vm554, %v933, %v1275
      %v2247 = vsel %vm554, %v934, %v1277
      %v2248 = vsel %vm554, %v935, %v1279
      %v2249 = vsel %vm554, %v936, %v1281
      %v2250 = vsel %vm554, %v937, %v1283
      %v2251 = vsel %vm554, %v938, %v1285
      %v2252 = vsel %vm554, %v939, %v1287
      %v2253 = vsel %vm554, %v940, %v1289
      %v2254 = vsel %vm554, %v941, %v1291
      %v2255 = vsel %vm554, %v942, %v1293
      %v2256 = vsel %vm554, %v943, %v1295
      %v2257 = vsel %vm554, %v944, %v1297
      %vm2258 = vcmask 64512
      %v2259 = vsel %vm2258, %v2226, %v1363
      %v2260 = vsel %vm2258, %v2227, %v1365
      %v2261 = vsel %vm2258, %v2228, %v1367
      %v2262 = vsel %vm2258, %v2229, %v1369
      %v2263 = vsel %vm2258, %v2230, %v1371
      %v2264 = vsel %vm2258, %v2231, %v1373
      %v2265 = vsel %vm2258, %v2232, %v1375
      %v2266 = vsel %vm2258, %v2233, %v1377
      %v2267 = vsel %vm2258, %v2234, %v1379
      %v2268 = vsel %vm2258, %v2235, %v1381
      %v2269 = vsel %vm2258, %v2236, %v1383
      %v2270 = vsel %vm2258, %v2237, %v1385
      %v2271 = vsel %vm2258, %v2238, %v1387
      %v2272 = vsel %vm2258, %v2239, %v1389
      %v2273 = vsel %vm2258, %v2240, %v1391
      %v2274 = vsel %vm2258, %v2241, %v1393
      %v2275 = vsel %vm2258, %v2242, %v1395
      %v2276 = vsel %vm2258, %v2243, %v1397
      %v2277 = vsel %vm2258, %v2244, %v1399
      %v2278 = vsel %vm2258, %v2245, %v1401
      %v2279 = vsel %vm2258, %v2246, %v1403
      %v2280 = vsel %vm2258, %v2247, %v1405
      %v2281 = vsel %vm2258, %v2248, %v1407
      %v2282 = vsel %vm2258, %v2249, %v1409
      %v2283 = vsel %vm2258, %v2250, %v1411
      %v2284 = vsel %vm2258, %v2251, %v1413
      %v2285 = vsel %vm2258, %v2252, %v1415
      %v2286 = vsel %vm2258, %v2253, %v1417
      %v2287 = vsel %vm2258, %v2254, %v1419
      %v2288 = vsel %vm2258, %v2255, %v1421
      %v2289 = vsel %vm2258, %v2256, %v1423
      %v2290 = vsel %vm2258, %v2257, %v1425
      %vm2291 = vcmask 97280
      %v2292 = vsel %vm2291, %v2259, %v1491
      %v2293 = vsel %vm2291, %v2260, %v1493
      %v2294 = vsel %vm2291, %v2261, %v1495
      %v2295 = vsel %vm2291, %v2262, %v1497
      %v2296 = vsel %vm2291, %v2263, %v1499
      %v2297 = vsel %vm2291, %v2264, %v1501
      %v2298 = vsel %vm2291, %v2265, %v1503
      %v2299 = vsel %vm2291, %v2266, %v1505
      %v2300 = vsel %vm2291, %v2267, %v1507
      %v2301 = vsel %vm2291, %v2268, %v1509
      %v2302 = vsel %vm2291, %v2269, %v1511
      %v2303 = vsel %vm2291, %v2270, %v1513
      %v2304 = vsel %vm2291, %v2271, %v1515
      %v2305 = vsel %vm2291, %v2272, %v1517
      %v2306 = vsel %vm2291, %v2273, %v1519
      %v2307 = vsel %vm2291, %v2274, %v1521
      %v2308 = vsel %vm2291, %v2275, %v1523
      %v2309 = vsel %vm2291, %v2276, %v1525
      %v2310 = vsel %vm2291, %v2277, %v1527
      %v2311 = vsel %vm2291, %v2278, %v1529
      %v2312 = vsel %vm2291, %v2279, %v1531
      %v2313 = vsel %vm2291, %v2280, %v1533
      %v2314 = vsel %vm2291, %v2281, %v1535
      %v2315 = vsel %vm2291, %v2282, %v1537
      %v2316 = vsel %vm2291, %v2283, %v1539
      %v2317 = vsel %vm2291, %v2284, %v1541
      %v2318 = vsel %vm2291, %v2285, %v1543
      %v2319 = vsel %vm2291, %v2286, %v1545
      %v2320 = vsel %vm2291, %v2287, %v1547
      %v2321 = vsel %vm2291, %v2288, %v1549
      %v2322 = vsel %vm2291, %v2289, %v1551
      %v2323 = vsel %vm2291, %v2290, %v1553
      %vm2324 = vcmask 130048
      %v2325 = vsel %vm2324, %v2292, %v1619
      %v2326 = vsel %vm2324, %v2293, %v1621
      %v2327 = vsel %vm2324, %v2294, %v1623
      %v2328 = vsel %vm2324, %v2295, %v1625
      %v2329 = vsel %vm2324, %v2296, %v1627
      %v2330 = vsel %vm2324, %v2297, %v1629
      %v2331 = vsel %vm2324, %v2298, %v1631
      %v2332 = vsel %vm2324, %v2299, %v1633
      %v2333 = vsel %vm2324, %v2300, %v1635
      %v2334 = vsel %vm2324, %v2301, %v1637
      %v2335 = vsel %vm2324, %v2302, %v1639
      %v2336 = vsel %vm2324, %v2303, %v1641
      %v2337 = vsel %vm2324, %v2304, %v1643
      %v2338 = vsel %vm2324, %v2305, %v1645
      %v2339 = vsel %vm2324, %v2306, %v1647
      %v2340 = vsel %vm2324, %v2307, %v1649
      %v2341 = vsel %vm2324, %v2308, %v1651
      %v2342 = vsel %vm2324, %v2309, %v1653
      %v2343 = vsel %vm2324, %v2310, %v1655
      %v2344 = vsel %vm2324, %v2311, %v1657
      %v2345 = vsel %vm2324, %v2312, %v1659
      %v2346 = vsel %vm2324, %v2313, %v1661
      %v2347 = vsel %vm2324, %v2314, %v1663
      %v2348 = vsel %vm2324, %v2315, %v1665
      %v2349 = vsel %vm2324, %v2316, %v1667
      %v2350 = vsel %vm2324, %v2317, %v1669
      %v2351 = vsel %vm2324, %v2318, %v1671
      %v2352 = vsel %vm2324, %v2319, %v1673
      %v2353 = vsel %vm2324, %v2320, %v1675
      %v2354 = vsel %vm2324, %v2321, %v1677
      %v2355 = vsel %vm2324, %v2322, %v1679
      %v2356 = vsel %vm2324, %v2323, %v1681
      %vm2357 = vcmask 162816
      %v2358 = vsel %vm2357, %v2325, %v1747
      %v2359 = vsel %vm2357, %v2326, %v1749
      %v2360 = vsel %vm2357, %v2327, %v1751
      %v2361 = vsel %vm2357, %v2328, %v1753
      %v2362 = vsel %vm2357, %v2329, %v1755
      %v2363 = vsel %vm2357, %v2330, %v1757
      %v2364 = vsel %vm2357, %v2331, %v1759
      %v2365 = vsel %vm2357, %v2332, %v1761
      %v2366 = vsel %vm2357, %v2333, %v1763
      %v2367 = vsel %vm2357, %v2334, %v1765
      %v2368 = vsel %vm2357, %v2335, %v1767
      %v2369 = vsel %vm2357, %v2336, %v1769
      %v2370 = vsel %vm2357, %v2337, %v1771
      %v2371 = vsel %vm2357, %v2338, %v1773
      %v2372 = vsel %vm2357, %v2339, %v1775
      %v2373 = vsel %vm2357, %v2340, %v1777
      %v2374 = vsel %vm2357, %v2341, %v1779
      %v2375 = vsel %vm2357, %v2342, %v1781
      %v2376 = vsel %vm2357, %v2343, %v1783
      %v2377 = vsel %vm2357, %v2344, %v1785
      %v2378 = vsel %vm2357, %v2345, %v1787
      %v2379 = vsel %vm2357, %v2346, %v1789
      %v2380 = vsel %vm2357, %v2347, %v1791
      %v2381 = vsel %vm2357, %v2348, %v1793
      %v2382 = vsel %vm2357, %v2349, %v1795
      %v2383 = vsel %vm2357, %v2350, %v1797
      %v2384 = vsel %vm2357, %v2351, %v1799
      %v2385 = vsel %vm2357, %v2352, %v1801
      %v2386 = vsel %vm2357, %v2353, %v1803
      %v2387 = vsel %vm2357, %v2354, %v1805
      %v2388 = vsel %vm2357, %v2355, %v1807
      %v2389 = vsel %vm2357, %v2356, %v1809
      %vm2390 = vcmask 195584
      %v2391 = vsel %vm2390, %v2358, %v1875
      %v2392 = vsel %vm2390, %v2359, %v1877
      %v2393 = vsel %vm2390, %v2360, %v1879
      %v2394 = vsel %vm2390, %v2361, %v1881
      %v2395 = vsel %vm2390, %v2362, %v1883
      %v2396 = vsel %vm2390, %v2363, %v1885
      %v2397 = vsel %vm2390, %v2364, %v1887
      %v2398 = vsel %vm2390, %v2365, %v1889
      %v2399 = vsel %vm2390, %v2366, %v1891
      %v2400 = vsel %vm2390, %v2367, %v1893
      %v2401 = vsel %vm2390, %v2368, %v1895
      %v2402 = vsel %vm2390, %v2369, %v1897
      %v2403 = vsel %vm2390, %v2370, %v1899
      %v2404 = vsel %vm2390, %v2371, %v1901
      %v2405 = vsel %vm2390, %v2372, %v1903
      %v2406 = vsel %vm2390, %v2373, %v1905
      %v2407 = vsel %vm2390, %v2374, %v1907
      %v2408 = vsel %vm2390, %v2375, %v1909
      %v2409 = vsel %vm2390, %v2376, %v1911
      %v2410 = vsel %vm2390, %v2377, %v1913
      %v2411 = vsel %vm2390, %v2378, %v1915
      %v2412 = vsel %vm2390, %v2379, %v1917
      %v2413 = vsel %vm2390, %v2380, %v1919
      %v2414 = vsel %vm2390, %v2381, %v1921
      %v2415 = vsel %vm2390, %v2382, %v1923
      %v2416 = vsel %vm2390, %v2383, %v1925
      %v2417 = vsel %vm2390, %v2384, %v1927
      %v2418 = vsel %vm2390, %v2385, %v1929
      %v2419 = vsel %vm2390, %v2386, %v1931
      %v2420 = vsel %vm2390, %v2387, %v1933
      %v2421 = vsel %vm2390, %v2388, %v1935
      %v2422 = vsel %vm2390, %v2389, %v1937
      %vm2423 = vcmask 228352
      %v2424 = vsel %vm2423, %v2391, %v2003
      %v2425 = vsel %vm2423, %v2392, %v2005
      %v2426 = vsel %vm2423, %v2393, %v2007
      %v2427 = vsel %vm2423, %v2394, %v2009
      %v2428 = vsel %vm2423, %v2395, %v2011
      %v2429 = vsel %vm2423, %v2396, %v2013
      %v2430 = vsel %vm2423, %v2397, %v2015
      %v2431 = vsel %vm2423, %v2398, %v2017
      %v2432 = vsel %vm2423, %v2399, %v2019
      %v2433 = vsel %vm2423, %v2400, %v2021
      %v2434 = vsel %vm2423, %v2401, %v2023
      %v2435 = vsel %vm2423, %v2402, %v2025
      %v2436 = vsel %vm2423, %v2403, %v2027
      %v2437 = vsel %vm2423, %v2404, %v2029
      %v2438 = vsel %vm2423, %v2405, %v2031
      %v2439 = vsel %vm2423, %v2406, %v2033
      %v2440 = vsel %vm2423, %v2407, %v2035
      %v2441 = vsel %vm2423, %v2408, %v2037
      %v2442 = vsel %vm2423, %v2409, %v2039
      %v2443 = vsel %vm2423, %v2410, %v2041
      %v2444 = vsel %vm2423, %v2411, %v2043
      %v2445 = vsel %vm2423, %v2412, %v2045
      %v2446 = vsel %vm2423, %v2413, %v2047
      %v2447 = vsel %vm2423, %v2414, %v2049
      %v2448 = vsel %vm2423, %v2415, %v2051
      %v2449 = vsel %vm2423, %v2416, %v2053
      %v2450 = vsel %vm2423, %v2417, %v2055
      %v2451 = vsel %vm2423, %v2418, %v2057
      %v2452 = vsel %vm2423, %v2419, %v2059
      %v2453 = vsel %vm2423, %v2420, %v2061
      %v2454 = vsel %vm2423, %v2421, %v2063
      %v2455 = vsel %vm2423, %v2422, %v2065
      %vm2456 = vcmask 261120
      %v2457 = vsel %vm2456, %v2424, %v2131
      %v2458 = vsel %vm2456, %v2425, %v2133
      %v2459 = vsel %vm2456, %v2426, %v2135
      %v2460 = vsel %vm2456, %v2427, %v2137
      %v2461 = vsel %vm2456, %v2428, %v2139
      %v2462 = vsel %vm2456, %v2429, %v2141
      %v2463 = vsel %vm2456, %v2430, %v2143
      %v2464 = vsel %vm2456, %v2431, %v2145
      %v2465 = vsel %vm2456, %v2432, %v2147
      %v2466 = vsel %vm2456, %v2433, %v2149
      %v2467 = vsel %vm2456, %v2434, %v2151
      %v2468 = vsel %vm2456, %v2435, %v2153
      %v2469 = vsel %vm2456, %v2436, %v2155
      %v2470 = vsel %vm2456, %v2437, %v2157
      %v2471 = vsel %vm2456, %v2438, %v2159
      %v2472 = vsel %vm2456, %v2439, %v2161
      %v2473 = vsel %vm2456, %v2440, %v2163
      %v2474 = vsel %vm2456, %v2441, %v2165
      %v2475 = vsel %vm2456, %v2442, %v2167
      %v2476 = vsel %vm2456, %v2443, %v2169
      %v2477 = vsel %vm2456, %v2444, %v2171
      %v2478 = vsel %vm2456, %v2445, %v2173
      %v2479 = vsel %vm2456, %v2446, %v2175
      %v2480 = vsel %vm2456, %v2447, %v2177
      %v2481 = vsel %vm2456, %v2448, %v2179
      %v2482 = vsel %vm2456, %v2449, %v2181
      %v2483 = vsel %vm2456, %v2450, %v2183
      %v2484 = vsel %vm2456, %v2451, %v2185
      %v2485 = vsel %vm2456, %v2452, %v2187
      %v2486 = vsel %vm2456, %v2453, %v2189
      %v2487 = vsel %vm2456, %v2454, %v2191
      %v2488 = vsel %vm2456, %v2455, %v2193
      %v2489 = vld [vmem:[%s373] sm:$0xff]
      %v2490 = vld [vmem:[%s373 + $0x8] sm:$0xff]
      %v2491 = vld [vmem:[%s373 + $0x10] sm:$0xff]
      %v2492 = vld [vmem:[%s373 + $0x18] sm:$0xff]
      %v2493 = vld [vmem:[%s373 + $0x20] sm:$0xf]
      %v2494 = vld [vmem:[%s376] sm:$0x1]
      %v2496 = vlaneseq
      %v2497 = vshrl.u32 %v2496, 7
      %v2498 = vsub.s32 0, %v2497
      %v2499 = vrot.slane %v2494, %v2498
      %vm2501 = vcmask 293888
      %v2503 = vsel %vm2501, %v2457, 0
      %v2506 = vsel %vm2501, %v2458, 0
      %v2509 = vsel %vm2501, %v2459, 0
      %v2512 = vsel %vm2501, %v2460, 0
      %v2515 = vsel %vm2501, %v2461, 0
      %v2518 = vsel %vm2501, %v2462, 0
      %v2521 = vsel %vm2501, %v2463, 0
      %v2524 = vsel %vm2501, %v2464, 0
      %v2527 = vsel %vm2501, %v2465, 0
      %v2530 = vsel %vm2501, %v2466, 0
      %v2533 = vsel %vm2501, %v2467, 0
      %v2536 = vsel %vm2501, %v2468, 0
      %v2539 = vsel %vm2501, %v2469, 0
      %v2542 = vsel %vm2501, %v2470, 0
      %v2545 = vsel %vm2501, %v2471, 0
      %v2548 = vsel %vm2501, %v2472, 0
      %v2551 = vsel %vm2501, %v2473, 0
      %v2554 = vsel %vm2501, %v2474, 0
      %v2557 = vsel %vm2501, %v2475, 0
      %v2560 = vsel %vm2501, %v2476, 0
      %v2563 = vsel %vm2501, %v2477, 0
      %v2566 = vsel %vm2501, %v2478, 0
      %v2569 = vsel %vm2501, %v2479, 0
      %v2572 = vsel %vm2501, %v2480, 0
      %v2575 = vsel %vm2501, %v2481, 0
      %v2578 = vsel %vm2501, %v2482, 0
      %v2581 = vsel %vm2501, %v2483, 0
      %v2584 = vsel %vm2501, %v2484, 0
      %v2587 = vsel %vm2501, %v2485, 0
      %v2590 = vsel %vm2501, %v2486, 0
      %v2593 = vsel %vm2501, %v2487, 0
      %v2596 = vsel %vm2501, %v2488, 0
      %v2599 = vsel %vm651, %v2493, 0
      %2601 = vmatprep.subr.mxu0 0.0
      %2602 = vmatpush1.msra.mxu0 0.0
      %2603 = vmatprep.subr.mxu0 0.0
      %2604 = vmatpush1.msra.mxu0 0.0
      %2605 = vmatprep.subr.mxu0 0.0
      %2606 = vmatpush1.msra.mxu0 0.0
      %2607 = vmatprep.subr.mxu0 0.0
      %2608 = vmatpush1.msra.mxu0 0.0
      %2609 = vmatprep.subr.mxu0 0.0
      %2610 = vmatpush1.msra.mxu0 0.0
      %2611 = vmatprep.subr.mxu0 0.0
      %2612 = vmatpush1.msra.mxu0 0.0
      %2613 = vmatprep.subr.mxu0 0.0
      %2614 = vmatpush1.msra.mxu0 0.0
      %2615 = vmatprep.subr.mxu0 0.0
      %2616 = vmatpush1.msra.mxu0 0.0
      %2617 = vmatprep.subr.mxu0 0.0
      %2618 = vmatpush1.msra.mxu0 0.0
      %2619 = vmatprep.subr.mxu0 0.0
      %2620 = vmatpush1.msra.mxu0 0.0
      %2621 = vmatprep.subr.mxu0 0.0
      %2622 = vmatpush1.msra.mxu0 0.0
      %2623 = vmatprep.subr.mxu0 0.0
      %2624 = vmatpush1.msra.mxu0 %v2599
      %2625 = vmatprep.subr.mxu0 0.0
      %2626 = vmatpush1.msra.mxu0 %v2492
      %2627 = vmatprep.subr.mxu0 0.0
      %2628 = vmatpush1.msra.mxu0 %v2491
      %2629 = vmatprep.subr.mxu0 0.0
      %2630 = vmatpush1.msra.mxu0 %v2490
      %2631 = vmatprep.subr.mxu0 0.0
      %2632 = vmatpush1.msra.mxu0 %v2489
      %2633 = vmatprep.subr.mxu0 0.0
      %2634 = vmatpush2.msra.mxu0 0.0
      %2635 = vmatprep.subr.mxu0 0.0
      %2636 = vmatpush2.msra.mxu0 0.0
      %2637 = vmatprep.subr.mxu0 0.0
      %2638 = vmatpush2.msra.mxu0 0.0
      %2639 = vmatprep.subr.mxu0 0.0
      %2640 = vmatpush2.msra.mxu0 0.0
      %2641 = vmatprep.subr.mxu0 0.0
      %2642 = vmatpush2.msra.mxu0 0.0
      %2643 = vmatprep.subr.mxu0 0.0
      %2644 = vmatpush2.msra.mxu0 0.0
      %2645 = vmatprep.subr.mxu0 0.0
      %2646 = vmatpush2.msra.mxu0 0.0
      %2647 = vmatprep.subr.mxu0 0.0
      %2648 = vmatpush2.msra.mxu0 0.0
      %2649 = vmatprep.subr.mxu0 0.0
      %2650 = vmatpush2.msra.mxu0 0.0
      %2651 = vmatprep.subr.mxu0 0.0
      %2652 = vmatpush2.msra.mxu0 0.0
      %2653 = vmatprep.subr.mxu0 0.0
      %2654 = vmatpush2.msra.mxu0 0.0
      %2655 = vmatprep.subr.mxu0 0.0
      %2656 = vmatpush2.msra.mxu0 0.0
      %2657 = vmatprep.subr.mxu0 0.0
      %2658 = vmatpush2.msra.mxu0 0.0
      %2659 = vmatprep.subr.mxu0 0.0
      %2660 = vmatpush2.msra.mxu0 0.0
      %2661 = vmatprep.subr.mxu0 0.0
      %2662 = vmatpush2.msra.mxu0 0.0
      %2663 = vmatprep.subr.mxu0 0.0
      %2664 = vmatpush2.msra.mxu0 0.0
      %2665 = vmatprep.mubr.f32.mxu0 0.0
      %2666 = vmatmul.mubr.f32.gmra.mxu0 %v2503
      %v2667 = vpop.f32.mrf.mxu0
      %v2668 = vadd.f32 %v2499, %v2667
      %v2669 = vpop.f32.mrf.mxu0
      %2670 = vmatprep.mubr.f32.mxu0 0.0
      %2671 = vmatmul.mubr.f32.gmra.mxu0 %v2506
      %v2672 = vpop.f32.mrf.mxu0
      %v2673 = vadd.f32 %v2499, %v2672
      %v2674 = vpop.f32.mrf.mxu0
      %2675 = vmatprep.mubr.f32.mxu0 0.0
      %2676 = vmatmul.mubr.f32.gmra.mxu0 %v2509
      %v2677 = vpop.f32.mrf.mxu0
      %v2678 = vadd.f32 %v2499, %v2677
      %v2679 = vpop.f32.mrf.mxu0
      %2680 = vmatprep.mubr.f32.mxu0 0.0
      %2681 = vmatmul.mubr.f32.gmra.mxu0 %v2512
      %v2682 = vpop.f32.mrf.mxu0
      %v2683 = vadd.f32 %v2499, %v2682
      %v2684 = vpop.f32.mrf.mxu0
      %2685 = vmatprep.mubr.f32.mxu0 0.0
      %2686 = vmatmul.mubr.f32.gmra.mxu0 %v2515
      %v2687 = vpop.f32.mrf.mxu0
      %v2688 = vadd.f32 %v2499, %v2687
      %v2689 = vpop.f32.mrf.mxu0
      %2690 = vmatprep.mubr.f32.mxu0 0.0
      %2691 = vmatmul.mubr.f32.gmra.mxu0 %v2518
      %v2692 = vpop.f32.mrf.mxu0
      %v2693 = vadd.f32 %v2499, %v2692
      %v2694 = vpop.f32.mrf.mxu0
      %2695 = vmatprep.mubr.f32.mxu0 0.0
      %2696 = vmatmul.mubr.f32.gmra.mxu0 %v2521
      %v2697 = vpop.f32.mrf.mxu0
      %v2698 = vadd.f32 %v2499, %v2697
      %v2699 = vpop.f32.mrf.mxu0
      %2700 = vmatprep.mubr.f32.mxu0 0.0
      %2701 = vmatmul.mubr.f32.gmra.mxu0 %v2524
      %v2702 = vpop.f32.mrf.mxu0
      %v2703 = vadd.f32 %v2499, %v2702
      %v2704 = vpop.f32.mrf.mxu0
      %2705 = vmatprep.mubr.f32.mxu0 0.0
      %2706 = vmatmul.mubr.f32.gmra.mxu0 %v2527
      %v2707 = vpop.f32.mrf.mxu0
      %v2708 = vadd.f32 %v2499, %v2707
      %v2709 = vpop.f32.mrf.mxu0
      %2710 = vmatprep.mubr.f32.mxu0 0.0
      %2711 = vmatmul.mubr.f32.gmra.mxu0 %v2530
      %v2712 = vpop.f32.mrf.mxu0
      %v2713 = vadd.f32 %v2499, %v2712
      %v2714 = vpop.f32.mrf.mxu0
      %2715 = vmatprep.mubr.f32.mxu0 0.0
      %2716 = vmatmul.mubr.f32.gmra.mxu0 %v2533
      %v2717 = vpop.f32.mrf.mxu0
      %v2718 = vadd.f32 %v2499, %v2717
      %v2719 = vpop.f32.mrf.mxu0
      %2720 = vmatprep.mubr.f32.mxu0 0.0
      %2721 = vmatmul.mubr.f32.gmra.mxu0 %v2536
      %v2722 = vpop.f32.mrf.mxu0
      %v2723 = vadd.f32 %v2499, %v2722
      %v2724 = vpop.f32.mrf.mxu0
      %2725 = vmatprep.mubr.f32.mxu0 0.0
      %2726 = vmatmul.mubr.f32.gmra.mxu0 %v2539
      %v2727 = vpop.f32.mrf.mxu0
      %v2728 = vadd.f32 %v2499, %v2727
      %v2729 = vpop.f32.mrf.mxu0
      %2730 = vmatprep.mubr.f32.mxu0 0.0
      %2731 = vmatmul.mubr.f32.gmra.mxu0 %v2542
      %v2732 = vpop.f32.mrf.mxu0
      %v2733 = vadd.f32 %v2499, %v2732
      %v2734 = vpop.f32.mrf.mxu0
      %2735 = vmatprep.mubr.f32.mxu0 0.0
      %2736 = vmatmul.mubr.f32.gmra.mxu0 %v2545
      %v2737 = vpop.f32.mrf.mxu0
      %v2738 = vadd.f32 %v2499, %v2737
      %v2739 = vpop.f32.mrf.mxu0
      %2740 = vmatprep.mubr.f32.mxu0 0.0
      %2741 = vmatmul.mubr.f32.gmra.mxu0 %v2548
      %v2742 = vpop.f32.mrf.mxu0
      %v2743 = vadd.f32 %v2499, %v2742
      %v2744 = vpop.f32.mrf.mxu0
      %2745 = vmatprep.mubr.f32.mxu0 0.0
      %2746 = vmatmul.mubr.f32.gmra.mxu0 %v2551
      %v2747 = vpop.f32.mrf.mxu0
      %v2748 = vadd.f32 %v2499, %v2747
      %v2749 = vpop.f32.mrf.mxu0
      %2750 = vmatprep.mubr.f32.mxu0 0.0
      %2751 = vmatmul.mubr.f32.gmra.mxu0 %v2554
      %v2752 = vpop.f32.mrf.mxu0
      %v2753 = vadd.f32 %v2499, %v2752
      %v2754 = vpop.f32.mrf.mxu0
      %2755 = vmatprep.mubr.f32.mxu0 0.0
      %2756 = vmatmul.mubr.f32.gmra.mxu0 %v2557
      %v2757 = vpop.f32.mrf.mxu0
      %v2758 = vadd.f32 %v2499, %v2757
      %v2759 = vpop.f32.mrf.mxu0
      %2760 = vmatprep.mubr.f32.mxu0 0.0
      %2761 = vmatmul.mubr.f32.gmra.mxu0 %v2560
      %v2762 = vpop.f32.mrf.mxu0
      %v2763 = vadd.f32 %v2499, %v2762
      %v2764 = vpop.f32.mrf.mxu0
      %2765 = vmatprep.mubr.f32.mxu0 0.0
      %2766 = vmatmul.mubr.f32.gmra.mxu0 %v2563
      %v2767 = vpop.f32.mrf.mxu0
      %v2768 = vadd.f32 %v2499, %v2767
      %v2769 = vpop.f32.mrf.mxu0
      %2770 = vmatprep.mubr.f32.mxu0 0.0
      %2771 = vmatmul.mubr.f32.gmra.mxu0 %v2566
      %v2772 = vpop.f32.mrf.mxu0
      %v2773 = vadd.f32 %v2499, %v2772
      %v2774 = vpop.f32.mrf.mxu0
      %2775 = vmatprep.mubr.f32.mxu0 0.0
      %2776 = vmatmul.mubr.f32.gmra.mxu0 %v2569
      %v2777 = vpop.f32.mrf.mxu0
      %v2778 = vadd.f32 %v2499, %v2777
      %v2779 = vpop.f32.mrf.mxu0
      %2780 = vmatprep.mubr.f32.mxu0 0.0
      %2781 = vmatmul.mubr.f32.gmra.mxu0 %v2572
      %v2782 = vpop.f32.mrf.mxu0
      %v2783 = vadd.f32 %v2499, %v2782
      %v2784 = vpop.f32.mrf.mxu0
      %2785 = vmatprep.mubr.f32.mxu0 0.0
      %2786 = vmatmul.mubr.f32.gmra.mxu0 %v2575
      %v2787 = vpop.f32.mrf.mxu0
      %v2788 = vadd.f32 %v2499, %v2787
      %v2789 = vpop.f32.mrf.mxu0
      %2790 = vmatprep.mubr.f32.mxu0 0.0
      %2791 = vmatmul.mubr.f32.gmra.mxu0 %v2578
      %v2792 = vpop.f32.mrf.mxu0
      %v2793 = vadd.f32 %v2499, %v2792
      %v2794 = vpop.f32.mrf.mxu0
      %2795 = vmatprep.mubr.f32.mxu0 0.0
      %2796 = vmatmul.mubr.f32.gmra.mxu0 %v2581
      %v2797 = vpop.f32.mrf.mxu0
      %v2798 = vadd.f32 %v2499, %v2797
      %v2799 = vpop.f32.mrf.mxu0
      %2800 = vmatprep.mubr.f32.mxu0 0.0
      %2801 = vmatmul.mubr.f32.gmra.mxu0 %v2584
      %v2802 = vpop.f32.mrf.mxu0
      %v2803 = vadd.f32 %v2499, %v2802
      %v2804 = vpop.f32.mrf.mxu0
      %2805 = vmatprep.mubr.f32.mxu0 0.0
      %2806 = vmatmul.mubr.f32.gmra.mxu0 %v2587
      %v2807 = vpop.f32.mrf.mxu0
      %v2808 = vadd.f32 %v2499, %v2807
      %v2809 = vpop.f32.mrf.mxu0
      %2810 = vmatprep.mubr.f32.mxu0 0.0
      %2811 = vmatmul.mubr.f32.gmra.mxu0 %v2590
      %v2812 = vpop.f32.mrf.mxu0
      %v2813 = vadd.f32 %v2499, %v2812
      %v2814 = vpop.f32.mrf.mxu0
      %2815 = vmatprep.mubr.f32.mxu0 0.0
      %2816 = vmatmul.mubr.f32.gmra.mxu0 %v2593
      %v2817 = vpop.f32.mrf.mxu0
      %v2818 = vadd.f32 %v2499, %v2817
      %v2819 = vpop.f32.mrf.mxu0
      %2820 = vmatprep.mubr.f32.mxu0 0.0
      %2821 = vmatmul.mubr.f32.gmra.mxu0 %v2596
      %v2822 = vpop.f32.mrf.mxu0
      %v2823 = vadd.f32 %v2499, %v2822
      %v2824 = vpop.f32.mrf.mxu0
      %2825 = vdwg.mxu0
      %v2826 = vld [vmem:[%s380] sm:$0xf]
      %v2827 = vld [vmem:[%s383] sm:$0x1]
      %v2829 = vlaneseq
      %v2830 = vshrl.u32 %v2829, 7
      %v2831 = vsub.s32 0, %v2830
      %v2832 = vrot.slane %v2827, %v2831
      %v2835 = vsel %vm554, %v2668, 0
      %v2838 = vsel %vm554, %v2673, 0
      %v2841 = vsel %vm554, %v2678, 0
      %v2844 = vsel %vm554, %v2683, 0
      %v2847 = vsel %vm554, %v2688, 0
      %v2850 = vsel %vm554, %v2693, 0
      %v2853 = vsel %vm554, %v2698, 0
      %v2856 = vsel %vm554, %v2703, 0
      %v2859 = vsel %vm554, %v2708, 0
      %v2862 = vsel %vm554, %v2713, 0
      %v2865 = vsel %vm554, %v2718, 0
      %v2868 = vsel %vm554, %v2723, 0
      %v2871 = vsel %vm554, %v2728, 0
      %v2874 = vsel %vm554, %v2733, 0
      %v2877 = vsel %vm554, %v2738, 0
      %v2880 = vsel %vm554, %v2743, 0
      %v2883 = vsel %vm554, %v2748, 0
      %v2886 = vsel %vm554, %v2753, 0
      %v2889 = vsel %vm554, %v2758, 0
      %v2892 = vsel %vm554, %v2763, 0
      %v2895 = vsel %vm554, %v2768, 0
      %v2898 = vsel %vm554, %v2773, 0
      %v2901 = vsel %vm554, %v2778, 0
      %v2904 = vsel %vm554, %v2783, 0
      %v2907 = vsel %vm554, %v2788, 0
      %v2910 = vsel %vm554, %v2793, 0
      %v2913 = vsel %vm554, %v2798, 0
      %v2916 = vsel %vm554, %v2803, 0
      %v2919 = vsel %vm554, %v2808, 0
      %v2922 = vsel %vm554, %v2813, 0
      %v2925 = vsel %vm554, %v2818, 0
      %v2928 = vsel %vm554, %v2823, 0
      %v2931 = vsel %vm651, %v2826, 0
      %2933 = vmatprep.subr.mxu0 0.0
      %2934 = vmatpush1.msra.mxu0 0.0
      %2935 = vmatprep.subr.mxu0 0.0
      %2936 = vmatpush1.msra.mxu0 0.0
      %2937 = vmatprep.subr.mxu0 0.0
      %2938 = vmatpush1.msra.mxu0 0.0
      %2939 = vmatprep.subr.mxu0 0.0
      %2940 = vmatpush1.msra.mxu0 0.0
      %2941 = vmatprep.subr.mxu0 0.0
      %2942 = vmatpush1.msra.mxu0 0.0
      %2943 = vmatprep.subr.mxu0 0.0
      %2944 = vmatpush1.msra.mxu0 0.0
      %2945 = vmatprep.subr.mxu0 0.0
      %2946 = vmatpush1.msra.mxu0 0.0
      %2947 = vmatprep.subr.mxu0 0.0
      %2948 = vmatpush1.msra.mxu0 0.0
      %2949 = vmatprep.subr.mxu0 0.0
      %2950 = vmatpush1.msra.mxu0 0.0
      %2951 = vmatprep.subr.mxu0 0.0
      %2952 = vmatpush1.msra.mxu0 0.0
      %2953 = vmatprep.subr.mxu0 0.0
      %2954 = vmatpush1.msra.mxu0 0.0
      %2955 = vmatprep.subr.mxu0 0.0
      %2956 = vmatpush1.msra.mxu0 0.0
      %2957 = vmatprep.subr.mxu0 0.0
      %2958 = vmatpush1.msra.mxu0 0.0
      %2959 = vmatprep.subr.mxu0 0.0
      %2960 = vmatpush1.msra.mxu0 0.0
      %2961 = vmatprep.subr.mxu0 0.0
      %2962 = vmatpush1.msra.mxu0 0.0
      %2963 = vmatprep.subr.mxu0 0.0
      %2964 = vmatpush1.msra.mxu0 %v2931
      %2965 = vmatprep.subr.mxu0 0.0
      %2966 = vmatpush2.msra.mxu0 0.0
      %2967 = vmatprep.subr.mxu0 0.0
      %2968 = vmatpush2.msra.mxu0 0.0
      %2969 = vmatprep.subr.mxu0 0.0
      %2970 = vmatpush2.msra.mxu0 0.0
      %2971 = vmatprep.subr.mxu0 0.0
      %2972 = vmatpush2.msra.mxu0 0.0
      %2973 = vmatprep.subr.mxu0 0.0
      %2974 = vmatpush2.msra.mxu0 0.0
      %2975 = vmatprep.subr.mxu0 0.0
      %2976 = vmatpush2.msra.mxu0 0.0
      %2977 = vmatprep.subr.mxu0 0.0
      %2978 = vmatpush2.msra.mxu0 0.0
      %2979 = vmatprep.subr.mxu0 0.0
      %2980 = vmatpush2.msra.mxu0 0.0
      %2981 = vmatprep.subr.mxu0 0.0
      %2982 = vmatpush2.msra.mxu0 0.0
      %2983 = vmatprep.subr.mxu0 0.0
      %2984 = vmatpush2.msra.mxu0 0.0
      %2985 = vmatprep.subr.mxu0 0.0
      %2986 = vmatpush2.msra.mxu0 0.0
      %2987 = vmatprep.subr.mxu0 0.0
      %2988 = vmatpush2.msra.mxu0 0.0
      %2989 = vmatprep.subr.mxu0 0.0
      %2990 = vmatpush2.msra.mxu0 0.0
      %2991 = vmatprep.subr.mxu0 0.0
      %2992 = vmatpush2.msra.mxu0 0.0
      %2993 = vmatprep.subr.mxu0 0.0
      %2994 = vmatpush2.msra.mxu0 0.0
      %2995 = vmatprep.subr.mxu0 0.0
      %2996 = vmatpush2.msra.mxu0 0.0
      %2997 = vmatprep.mubr.f32.mxu0 0.0
      %2998 = vmatmul.mubr.f32.gmra.mxu0 %v2835
      %v2999 = vpop.f32.mrf.mxu0
      %v3000 = vadd.f32 %v2832, %v2999
      %v3001 = vpop.f32.mrf.mxu0
      %3002 = vmatprep.mubr.f32.mxu0 0.0
      %3003 = vmatmul.mubr.f32.gmra.mxu0 %v2838
      %v3004 = vpop.f32.mrf.mxu0
      %v3005 = vadd.f32 %v2832, %v3004
      %v3006 = vpop.f32.mrf.mxu0
      %3007 = vmatprep.mubr.f32.mxu0 0.0
      %3008 = vmatmul.mubr.f32.gmra.mxu0 %v2841
      %v3009 = vpop.f32.mrf.mxu0
      %v3010 = vadd.f32 %v2832, %v3009
      %v3011 = vpop.f32.mrf.mxu0
      %3012 = vmatprep.mubr.f32.mxu0 0.0
      %3013 = vmatmul.mubr.f32.gmra.mxu0 %v2844
      %v3014 = vpop.f32.mrf.mxu0
      %v3015 = vadd.f32 %v2832, %v3014
      %v3016 = vpop.f32.mrf.mxu0
      %3017 = vmatprep.mubr.f32.mxu0 0.0
      %3018 = vmatmul.mubr.f32.gmra.mxu0 %v2847
      %v3019 = vpop.f32.mrf.mxu0
      %v3020 = vadd.f32 %v2832, %v3019
      %v3021 = vpop.f32.mrf.mxu0
      %3022 = vmatprep.mubr.f32.mxu0 0.0
      %3023 = vmatmul.mubr.f32.gmra.mxu0 %v2850
      %v3024 = vpop.f32.mrf.mxu0
      %v3025 = vadd.f32 %v2832, %v3024
      %v3026 = vpop.f32.mrf.mxu0
      %3027 = vmatprep.mubr.f32.mxu0 0.0
      %3028 = vmatmul.mubr.f32.gmra.mxu0 %v2853
      %v3029 = vpop.f32.mrf.mxu0
      %v3030 = vadd.f32 %v2832, %v3029
      %v3031 = vpop.f32.mrf.mxu0
      %3032 = vmatprep.mubr.f32.mxu0 0.0
      %3033 = vmatmul.mubr.f32.gmra.mxu0 %v2856
      %v3034 = vpop.f32.mrf.mxu0
      %v3035 = vadd.f32 %v2832, %v3034
      %v3036 = vpop.f32.mrf.mxu0
      %3037 = vmatprep.mubr.f32.mxu0 0.0
      %3038 = vmatmul.mubr.f32.gmra.mxu0 %v2859
      %v3039 = vpop.f32.mrf.mxu0
      %v3040 = vadd.f32 %v2832, %v3039
      %v3041 = vpop.f32.mrf.mxu0
      %3042 = vmatprep.mubr.f32.mxu0 0.0
      %3043 = vmatmul.mubr.f32.gmra.mxu0 %v2862
      %v3044 = vpop.f32.mrf.mxu0
      %v3045 = vadd.f32 %v2832, %v3044
      %v3046 = vpop.f32.mrf.mxu0
      %3047 = vmatprep.mubr.f32.mxu0 0.0
      %3048 = vmatmul.mubr.f32.gmra.mxu0 %v2865
      %v3049 = vpop.f32.mrf.mxu0
      %v3050 = vadd.f32 %v2832, %v3049
      %v3051 = vpop.f32.mrf.mxu0
      %3052 = vmatprep.mubr.f32.mxu0 0.0
      %3053 = vmatmul.mubr.f32.gmra.mxu0 %v2868
      %v3054 = vpop.f32.mrf.mxu0
      %v3055 = vadd.f32 %v2832, %v3054
      %v3056 = vpop.f32.mrf.mxu0
      %3057 = vmatprep.mubr.f32.mxu0 0.0
      %3058 = vmatmul.mubr.f32.gmra.mxu0 %v2871
      %v3059 = vpop.f32.mrf.mxu0
      %v3060 = vadd.f32 %v2832, %v3059
      %v3061 = vpop.f32.mrf.mxu0
      %3062 = vmatprep.mubr.f32.mxu0 0.0
      %3063 = vmatmul.mubr.f32.gmra.mxu0 %v2874
      %v3064 = vpop.f32.mrf.mxu0
      %v3065 = vadd.f32 %v2832, %v3064
      %v3066 = vpop.f32.mrf.mxu0
      %3067 = vmatprep.mubr.f32.mxu0 0.0
      %3068 = vmatmul.mubr.f32.gmra.mxu0 %v2877
      %v3069 = vpop.f32.mrf.mxu0
      %v3070 = vadd.f32 %v2832, %v3069
      %v3071 = vpop.f32.mrf.mxu0
      %3072 = vmatprep.mubr.f32.mxu0 0.0
      %3073 = vmatmul.mubr.f32.gmra.mxu0 %v2880
      %v3074 = vpop.f32.mrf.mxu0
      %v3075 = vadd.f32 %v2832, %v3074
      %v3076 = vpop.f32.mrf.mxu0
      %3077 = vmatprep.mubr.f32.mxu0 0.0
      %3078 = vmatmul.mubr.f32.gmra.mxu0 %v2883
      %v3079 = vpop.f32.mrf.mxu0
      %v3080 = vadd.f32 %v2832, %v3079
      %v3081 = vpop.f32.mrf.mxu0
      %3082 = vmatprep.mubr.f32.mxu0 0.0
      %3083 = vmatmul.mubr.f32.gmra.mxu0 %v2886
      %v3084 = vpop.f32.mrf.mxu0
      %v3085 = vadd.f32 %v2832, %v3084
      %v3086 = vpop.f32.mrf.mxu0
      %3087 = vmatprep.mubr.f32.mxu0 0.0
      %3088 = vmatmul.mubr.f32.gmra.mxu0 %v2889
      %v3089 = vpop.f32.mrf.mxu0
      %v3090 = vadd.f32 %v2832, %v3089
      %v3091 = vpop.f32.mrf.mxu0
      %3092 = vmatprep.mubr.f32.mxu0 0.0
      %3093 = vmatmul.mubr.f32.gmra.mxu0 %v2892
      %v3094 = vpop.f32.mrf.mxu0
      %v3095 = vadd.f32 %v2832, %v3094
      %v3096 = vpop.f32.mrf.mxu0
      %3097 = vmatprep.mubr.f32.mxu0 0.0
      %3098 = vmatmul.mubr.f32.gmra.mxu0 %v2895
      %v3099 = vpop.f32.mrf.mxu0
      %v3100 = vadd.f32 %v2832, %v3099
      %v3101 = vpop.f32.mrf.mxu0
      %3102 = vmatprep.mubr.f32.mxu0 0.0
      %3103 = vmatmul.mubr.f32.gmra.mxu0 %v2898
      %v3104 = vpop.f32.mrf.mxu0
      %v3105 = vadd.f32 %v2832, %v3104
      %v3106 = vpop.f32.mrf.mxu0
      %3107 = vmatprep.mubr.f32.mxu0 0.0
      %3108 = vmatmul.mubr.f32.gmra.mxu0 %v2901
      %v3109 = vpop.f32.mrf.mxu0
      %v3110 = vadd.f32 %v2832, %v3109
      %v3111 = vpop.f32.mrf.mxu0
      %3112 = vmatprep.mubr.f32.mxu0 0.0
      %3113 = vmatmul.mubr.f32.gmra.mxu0 %v2904
      %v3114 = vpop.f32.mrf.mxu0
      %v3115 = vadd.f32 %v2832, %v3114
      %v3116 = vpop.f32.mrf.mxu0
      %3117 = vmatprep.mubr.f32.mxu0 0.0
      %3118 = vmatmul.mubr.f32.gmra.mxu0 %v2907
      %v3119 = vpop.f32.mrf.mxu0
      %v3120 = vadd.f32 %v2832, %v3119
      %v3121 = vpop.f32.mrf.mxu0
      %3122 = vmatprep.mubr.f32.mxu0 0.0
      %3123 = vmatmul.mubr.f32.gmra.mxu0 %v2910
      %v3124 = vpop.f32.mrf.mxu0
      %v3125 = vadd.f32 %v2832, %v3124
      %v3126 = vpop.f32.mrf.mxu0
      %3127 = vmatprep.mubr.f32.mxu0 0.0
      %3128 = vmatmul.mubr.f32.gmra.mxu0 %v2913
      %v3129 = vpop.f32.mrf.mxu0
      %v3130 = vadd.f32 %v2832, %v3129
      %v3131 = vpop.f32.mrf.mxu0
      %3132 = vmatprep.mubr.f32.mxu0 0.0
      %3133 = vmatmul.mubr.f32.gmra.mxu0 %v2916
      %v3134 = vpop.f32.mrf.mxu0
      %v3135 = vadd.f32 %v2832, %v3134
      %v3136 = vpop.f32.mrf.mxu0
      %3137 = vmatprep.mubr.f32.mxu0 0.0
      %3138 = vmatmul.mubr.f32.gmra.mxu0 %v2919
      %v3139 = vpop.f32.mrf.mxu0
      %v3140 = vadd.f32 %v2832, %v3139
      %v3141 = vpop.f32.mrf.mxu0
      %3142 = vmatprep.mubr.f32.mxu0 0.0
      %3143 = vmatmul.mubr.f32.gmra.mxu0 %v2922
      %v3144 = vpop.f32.mrf.mxu0
      %v3145 = vadd.f32 %v2832, %v3144
      %v3146 = vpop.f32.mrf.mxu0
      %3147 = vmatprep.mubr.f32.mxu0 0.0
      %3148 = vmatmul.mubr.f32.gmra.mxu0 %v2925
      %v3149 = vpop.f32.mrf.mxu0
      %v3150 = vadd.f32 %v2832, %v3149
      %v3151 = vpop.f32.mrf.mxu0
      %3152 = vmatprep.mubr.f32.mxu0 0.0
      %3153 = vmatmul.mubr.f32.gmra.mxu0 %v2928
      %v3154 = vpop.f32.mrf.mxu0
      %v3155 = vadd.f32 %v2832, %v3154
      %v3156 = vpop.f32.mrf.mxu0
      %3157 = vdwg.mxu0
      %v3158 = vadd.f32 %v514, %v3000
      %v3159 = vadd.f32 %v515, %v3005
      %v3160 = vadd.f32 %v516, %v3010
      %v3161 = vadd.f32 %v517, %v3015
      %v3162 = vadd.f32 %v518, %v3020
      %v3163 = vadd.f32 %v519, %v3025
      %v3164 = vadd.f32 %v520, %v3030
      %v3165 = vadd.f32 %v521, %v3035
      %v3166 = vadd.f32 %v522, %v3040
      %v3167 = vadd.f32 %v523, %v3045
      %v3168 = vadd.f32 %v524, %v3050
      %v3169 = vadd.f32 %v525, %v3055
      %v3170 = vadd.f32 %v526, %v3060
      %v3171 = vadd.f32 %v527, %v3065
      %v3172 = vadd.f32 %v528, %v3070
      %v3173 = vadd.f32 %v529, %v3075
      %v3174 = vadd.f32 %v530, %v3080
      %v3175 = vadd.f32 %v531, %v3085
      %v3176 = vadd.f32 %v532, %v3090
      %v3177 = vadd.f32 %v533, %v3095
      %v3178 = vadd.f32 %v534, %v3100
      %v3179 = vadd.f32 %v535, %v3105
      %v3180 = vadd.f32 %v536, %v3110
      %v3181 = vadd.f32 %v537, %v3115
      %v3182 = vadd.f32 %v538, %v3120
      %v3183 = vadd.f32 %v539, %v3125
      %v3184 = vadd.f32 %v540, %v3130
      %v3185 = vadd.f32 %v541, %v3135
      %v3186 = vadd.f32 %v542, %v3140
      %v3187 = vadd.f32 %v543, %v3145
      %v3188 = vadd.f32 %v544, %v3150
      %v3189 = vadd.f32 %v545, %v3155
      %v3190 = vmax.f32 %v3158, 0.0
      %v3191 = vmax.f32 %v3159, 0.0
      %v3192 = vmax.f32 %v3160, 0.0
      %v3193 = vmax.f32 %v3161, 0.0
      %v3194 = vmax.f32 %v3162, 0.0
      %v3195 = vmax.f32 %v3163, 0.0
      %v3196 = vmax.f32 %v3164, 0.0
      %v3197 = vmax.f32 %v3165, 0.0
      %v3198 = vmax.f32 %v3166, 0.0
      %v3199 = vmax.f32 %v3167, 0.0
      %v3200 = vmax.f32 %v3168, 0.0
      %v3201 = vmax.f32 %v3169, 0.0
      %v3202 = vmax.f32 %v3170, 0.0
      %v3203 = vmax.f32 %v3171, 0.0
      %v3204 = vmax.f32 %v3172, 0.0
      %v3205 = vmax.f32 %v3173, 0.0
      %v3206 = vmax.f32 %v3174, 0.0
      %v3207 = vmax.f32 %v3175, 0.0
      %v3208 = vmax.f32 %v3176, 0.0
      %v3209 = vmax.f32 %v3177, 0.0
      %v3210 = vmax.f32 %v3178, 0.0
      %v3211 = vmax.f32 %v3179, 0.0
      %v3212 = vmax.f32 %v3180, 0.0
      %v3213 = vmax.f32 %v3181, 0.0
      %v3214 = vmax.f32 %v3182, 0.0
      %v3215 = vmax.f32 %v3183, 0.0
      %v3216 = vmax.f32 %v3184, 0.0
      %v3217 = vmax.f32 %v3185, 0.0
      %v3218 = vmax.f32 %v3186, 0.0
      %v3219 = vmax.f32 %v3187, 0.0
      %v3220 = vmax.f32 %v3188, 0.0
      %v3221 = vmax.f32 %v3189, 0.0
      %3222 = vst.msk [vmem:[%s388] sm:$0xff] %vm554, %v3190
      %3223 = vst.msk [vmem:[%s388 + $0x8] sm:$0xff] %vm554, %v3191
      %3224 = vst.msk [vmem:[%s388 + $0x10] sm:$0xff] %vm554, %v3192
      %3225 = vst.msk [vmem:[%s388 + $0x18] sm:$0xff] %vm554, %v3193
      %3226 = vst.msk [vmem:[%s388 + $0x20] sm:$0xff] %vm554, %v3194
      %3227 = vst.msk [vmem:[%s388 + $0x28] sm:$0xff] %vm554, %v3195
      %3228 = vst.msk [vmem:[%s388 + $0x30] sm:$0xff] %vm554, %v3196
      %3229 = vst.msk [vmem:[%s388 + $0x38] sm:$0xff] %vm554, %v3197
      %3230 = vst.msk [vmem:[%s388 + $0x40] sm:$0xff] %vm554, %v3198
      %3231 = vst.msk [vmem:[%s388 + $0x48] sm:$0xff] %vm554, %v3199
      %3232 = vst.msk [vmem:[%s388 + $0x50] sm:$0xff] %vm554, %v3200
      %3233 = vst.msk [vmem:[%s388 + $0x58] sm:$0xff] %vm554, %v3201
      %3234 = vst.msk [vmem:[%s388 + $0x60] sm:$0xff] %vm554, %v3202
      %3235 = vst.msk [vmem:[%s388 + $0x68] sm:$0xff] %vm554, %v3203
      %3236 = vst.msk [vmem:[%s388 + $0x70] sm:$0xff] %vm554, %v3204
      %3237 = vst.msk [vmem:[%s388 + $0x78] sm:$0xff] %vm554, %v3205
      %3238 = vst.msk [vmem:[%s388 + $0x80] sm:$0xff] %vm554, %v3206
      %3239 = vst.msk [vmem:[%s388 + $0x88] sm:$0xff] %vm554, %v3207
      %3240 = vst.msk [vmem:[%s388 + $0x90] sm:$0xff] %vm554, %v3208
      %3241 = vst.msk [vmem:[%s388 + $0x98] sm:$0xff] %vm554, %v3209
      %3242 = vst.msk [vmem:[%s388 + $0xa0] sm:$0xff] %vm554, %v3210
      %3243 = vst.msk [vmem:[%s388 + $0xa8] sm:$0xff] %vm554, %v3211
      %3244 = vst.msk [vmem:[%s388 + $0xb0] sm:$0xff] %vm554, %v3212
      %3245 = vst.msk [vmem:[%s388 + $0xb8] sm:$0xff] %vm554, %v3213
      %3246 = vst.msk [vmem:[%s388 + $0xc0] sm:$0xff] %vm554, %v3214
      %3247 = vst.msk [vmem:[%s388 + $0xc8] sm:$0xff] %vm554, %v3215
      %3248 = vst.msk [vmem:[%s388 + $0xd0] sm:$0xff] %vm554, %v3216
      %3249 = vst.msk [vmem:[%s388 + $0xd8] sm:$0xff] %vm554, %v3217
      %3250 = vst.msk [vmem:[%s388 + $0xe0] sm:$0xff] %vm554, %v3218
      %3251 = vst.msk [vmem:[%s388 + $0xe8] sm:$0xff] %vm554, %v3219
      %3252 = vst.msk [vmem:[%s388 + $0xf0] sm:$0xff] %vm554, %v3220
      %3253 = vst.msk [vmem:[%s388 + $0xf8] sm:$0xff] %vm554, %v3221
      %s3254 = smul.u32 32, %s22
      %p3255 = scmp.lt.s32.totalorder %s3254, 63
      %s3256 = scalar_select %p3255, %s3254, 63
      %s3257 = smul.addr %s3256, 8
      %s3258 = scalar_lea.vmem %s7, %s3257
      // Predicated region
      $region53: #{resblock_forward.1} parent=47 // pred_check
        %p3259 = pneg %p230
      $region54: #{resblock_forward.1} parent=47 // pred_check_branch
        %3261 = sbr.rel (%p3259) target = $region56
      $region55: #{resblock_forward.1} parent=47 // pred_region
        %s3262 = smul.u32 32, %s22
      $region56: #{resblock_forward.1} parent=47 // pred_fallthru
        _
    $region48: #{resblock_forward.1} parent=5 // pred_fallthru
      _
    %p3263 = scmp.le.s32.totalorder 2, %s13
    // Predicated region
    $region57: #{resblock_forward.1} parent=5 // pred_check
      %p3264 = pneg %p3263
    $region58: #{resblock_forward.1} parent=5 // pred_check_branch
      %3266 = sbr.rel (%p3264) target = $region60
    $region59: #{resblock_forward.1} parent=5 // pred_region
      %s3267 = ssub.s32 %s13, 2
      // Predicated region
      $region61: #{resblock_forward.1} parent=59 // pred_check
        %p3268 = pneg %p236
      $region62: #{resblock_forward.1} parent=59 // pred_check_branch
        %3270 = sbr.rel (%p3268) target = $region64
      $region63: #{resblock_forward.1} parent=59 // pred_region
        %s3271 = smul.u32 32, %s24
        %p3272 = scmp.lt.s32.totalorder %s3271, 63
        %s3273 = scalar_select %p3272, %s3271, 63
        %s3274 = smul.addr %s3273, 8
        %s3275 = scalar_lea.vmem %s7, %s3274
      $region64: #{resblock_forward.1} parent=59 // pred_fallthru
        _
    $region60: #{resblock_forward.1} parent=5 // pred_fallthru
      _
  $region6: #{resblock_forward.1} parent=0 // loop_footer
    %s17 = sadd.s32 1, %s13
  $region7: #{resblock_forward.1} parent=0 // loop_footer_branch
    %12 = sbr.rel target = $region3
  $region8: #{resblock_forward.1} parent=0 // loop_exit
    _

</llo_original>
